<compile_context>
chip_gen: v7x
topology: tpu7x:2x2x1
jax: 0.10.0
libtpu: 0.0.40
codegen_flags: <defaults>
</compile_context>

<pallas_src>
import math

import jax
import jax.numpy as jnp
from jax.experimental import pallas as pl
from jax.experimental.pallas import tpu as pltpu

# ----------------------------- small synthetic BERT config -----------------------------
B, S, H = 2, 8, 128          # batch, sequence length, hidden size ("bert_emb_size")
NH, HD = 2, 64               # num attention heads, head dim (NH * HD == H)
FF = 256                     # intermediate (FFN) size
L = 2                        # number of encoder layers
V = 64                       # vocab size
MAXPOS = 16                  # max position embeddings
TYPEV = 2                    # token-type vocab
C = 2                        # num_classes
CP = 128                     # classifier output padded to a full 128-lane slab
LN_EPS = 1e-12               # BERT LayerNorm eps

# rows of the per-layer vector slab (lane width FF=256; H-wide rows live in [:, :H])
R_BQ, R_BK, R_BV, R_BO, R_B1, R_B2, R_G1, R_BE1, R_G2, R_BE2 = range(10)
NVR = 16                     # padded row count (sublane multiple of 8)
# rows of the misc vector slab (lane width H)
M_EG, M_EB, M_PB, M_CB = range(4)
NMR = 8


# ----------------------------- in-kernel helpers (f32 math) -----------------------------
def _layernorm(x, gamma, beta):
    mu = jnp.mean(x, axis=-1, keepdims=True)
    var = jnp.mean(jnp.square(x - mu), axis=-1, keepdims=True)
    return (x - mu) * jax.lax.rsqrt(var + LN_EPS) * gamma + beta


def _gelu(x):
    # TODO(synk): PyTorch BERT uses exact erf-GELU; tanh approximation used here.
    c = 0.7978845608028654  # sqrt(2/pi)
    return 0.5 * x * (1.0 + jnp.tanh(c * (x + 0.044715 * x * x * x)))


# ----------------------------- fused Pallas kernel (grid = (L,)) -----------------------------
def fused_bert_kernel(emb_ref, bias_ref, misc_ref, poolw_ref, clsw_ref,
                      wqkv_ref, wo_ref, w1_ref, w2_ref, vec_ref,
                      out_ref, x_sc):
    layer = pl.program_id(0)
    M = B * S

    # step 0: embeddings LayerNorm into the carried hidden-state scratch
    @pl.when(layer == 0)
    def _():
        eg = misc_ref[M_EG:M_EG + 1, :]
        eb = misc_ref[M_EB:M_EB + 1, :]
        x_sc[...] = _layernorm(emb_ref[...].reshape(M, H), eg, eb)

    x = x_sc[...]                               # (M, H) f32, carried across layer steps
    xb = x.astype(jnp.bfloat16)

    # per-layer vectors (f32), unpacked by static slices from one slab
    bq = vec_ref[R_BQ:R_BQ + 1, :H]
    bk = vec_ref[R_BK:R_BK + 1, :H]
    bv = vec_ref[R_BV:R_BV + 1, :H]
    bo = vec_ref[R_BO:R_BO + 1, :H]
    b1 = vec_ref[R_B1:R_B1 + 1, :]              # full FF width
    b2 = vec_ref[R_B2:R_B2 + 1, :H]
    g1 = vec_ref[R_G1:R_G1 + 1, :H]
    be1 = vec_ref[R_BE1:R_BE1 + 1, :H]
    g2 = vec_ref[R_G2:R_G2 + 1, :H]
    be2 = vec_ref[R_BE2:R_BE2 + 1, :H]

    # fused QKV: one (M,H)x(H,3H) bf16 MXU pass instead of three N=128 passes
    qkv = jnp.dot(xb, wqkv_ref[...], preferred_element_type=jnp.float32)   # (M, 3H) f32
    scale = 1.0 / math.sqrt(HD)
    q = ((qkv[:, 0:H] + bq) * scale).reshape(B, S, H).astype(jnp.bfloat16)  # scale folded once
    k = (qkv[:, H:2 * H] + bk).reshape(B, S, H).astype(jnp.bfloat16)
    v = (qkv[:, 2 * H:3 * H] + bv).reshape(B, S, H).astype(jnp.bfloat16)

    # additive key mask bias, broadcast once per layer (hoisted out of the head loop)
    bias_full = jnp.broadcast_to(bias_ref[...], (B, S, S))                  # (B, S, S) f32

    # attention: tiny static head loop, contexts kept in vregs (no scratch, no masked
    # 64-lane stores); per-head context folded straight into the output projection
    attn = jnp.zeros((M, H), jnp.float32)
    for h in range(NH):
        sl = slice(h * HD, (h + 1) * HD)
        s = jnp.einsum('bqd,bkd->bqk', q[:, :, sl], k[:, :, sl],
                       preferred_element_type=jnp.float32) + bias_full
        s = s - jnp.max(s, axis=-1, keepdims=True)
        p = jnp.exp(s)
        p = p * pl.reciprocal(jnp.sum(p, axis=-1, keepdims=True), approx=True)
        ctx = jnp.einsum('bqk,bkd->bqd', p.astype(jnp.bfloat16), v[:, :, sl],
                         preferred_element_type=jnp.float32)               # (B, S, HD)
        attn = attn + jnp.dot(ctx.reshape(M, HD).astype(jnp.bfloat16),
                              wo_ref[sl, :], preferred_element_type=jnp.float32)
    attn = attn + bo

    h1 = _layernorm(x + attn, g1, be1)                                      # post-attn LN (f32)
    ff = _gelu(jnp.dot(h1.astype(jnp.bfloat16), w1_ref[...],
                       preferred_element_type=jnp.float32) + b1)
    ff = jnp.dot(ff.astype(jnp.bfloat16), w2_ref[...],
                 preferred_element_type=jnp.float32) + b2
    x_new = _layernorm(h1 + ff, g2, be2)                                    # post-FFN LN (f32)
    x_sc[...] = x_new                                                       # carry to next layer

    # last step: pooler (dense + tanh on [CLS]) then classifier (padded to 128 lanes)
    @pl.when(layer == pl.num_programs(0) - 1)
    def _():
        cls = x_new.reshape(B, S, H)[:, 0, :]                               # (B, H)
        pooled = jnp.tanh(
            jnp.dot(cls.astype(jnp.bfloat16), poolw_ref[...],
                    preferred_element_type=jnp.float32)
            + misc_ref[M_PB:M_PB + 1, :])
        out_ref[...] = (
            jnp.dot(pooled.astype(jnp.bfloat16), clsw_ref[...],
                    preferred_element_type=jnp.float32)
            + misc_ref[M_CB:M_CB + 1, :])


# ----------------------------- pallas_call wrapper -----------------------------
def faithful_bert_classifier_forward(params, input_ids, attention_mask, token_type_ids):
    # embeddings: gathers are glue (plain JAX); everything else runs in the fused kernel
    emb = (params["word_emb"][input_ids]
           + params["pos_emb"][:S][None, :, :]
           + params["type_emb"][token_type_ids]).astype(jnp.float32)        # (B, S, H)

    # additive key-axis mask bias, computed once and reused for all layers
    attn_bias = ((1.0 - attention_mask.astype(jnp.float32))
                 .reshape(B, 1, S) * -10000.0)                               # (B, 1, S)

    grid_spec = pltpu.PrefetchScalarGridSpec(
        num_scalar_prefetch=0,
        grid=(L,),
        in_specs=[
            pl.BlockSpec((B, S, H), lambda l: (0, 0, 0)),           # embeddings (const)
            pl.BlockSpec((B, 1, S), lambda l: (0, 0, 0)),           # mask bias  (const)
            pl.BlockSpec((NMR, H), lambda l: (0, 0)),               # misc vectors (const)
            pl.BlockSpec((H, H), lambda l: (0, 0)),                 # pooler W     (const)
            pl.BlockSpec((H, CP), lambda l: (0, 0)),                # classifier W (const)
            pl.BlockSpec((None, H, 3 * H), lambda l: (l, 0, 0)),    # W_qkv  per layer
            pl.BlockSpec((None, H, H), lambda l: (l, 0, 0)),        # W_o    per layer
            pl.BlockSpec((None, H, FF), lambda l: (l, 0, 0)),       # W_1    per layer
            pl.BlockSpec((None, FF, H), lambda l: (l, 0, 0)),       # W_2    per layer
            pl.BlockSpec((None, NVR, FF), lambda l: (l, 0, 0)),     # vector slab per layer
        ],
        out_specs=pl.BlockSpec((B, CP), lambda l: (0, 0)),          # resident, written last
        scratch_shapes=[pltpu.VMEM((B * S, H), jnp.float32)],       # carried hidden state
    )

    logits_pad = pl.pallas_call(
        fused_bert_kernel,
        out_shape=jax.ShapeDtypeStruct((B, CP), jnp.float32),
        grid_spec=grid_spec,
        compiler_params=pltpu.CompilerParams(
            dimension_semantics=("arbitrary",),       # layer axis carries state
            vmem_limit_bytes=32 * 1024 * 1024),       # explicit budget (v7x-safe)
    )(emb, attn_bias, params["misc_vec"], params["pool_w"], params["cls_w"],
      params["wqkv"], params["wo"], params["w1"], params["w2"], params["vecs"])
    return logits_pad[:, :C]                                                 # (B, num_classes)


# ----------------------------- parameters (pre-packed slabs) -----------------------------
def init_params(key):
    std = 0.02
    ks = iter(jax.random.split(key, 64))

    def w(din, dout):
        return jax.random.normal(next(ks), (din, dout), jnp.float32) * std

    params = {
        "word_emb": jax.random.normal(next(ks), (V, H), jnp.float32) * std,
        "pos_emb": jax.random.normal(next(ks), (MAXPOS, H), jnp.float32) * std,
        "type_emb": jax.random.normal(next(ks), (TYPEV, H), jnp.float32) * std,
    }

    wqkv_l, wo_l, w1_l, w2_l, vec_l = [], [], [], [], []
    for _ in range(L):
        wq, wk, wv = w(H, H), w(H, H), w(H, H)
        wqkv_l.append(jnp.concatenate([wq, wk, wv], axis=1))     # (H, 3H) fused QKV weight
        wo_l.append(w(H, H))
        w1_l.append(w(H, FF))
        w2_l.append(w(FF, H))
        # packed per-layer vectors: Linear biases zero, LN gamma=1 / beta=0 (matches ref init)
        vrow = jnp.zeros((NVR, FF), jnp.float32)
        vrow = vrow.at[R_G1, :H].set(1.0).at[R_G2, :H].set(1.0)
        vec_l.append(vrow)

    params["wqkv"] = jnp.stack(wqkv_l).astype(jnp.bfloat16)      # (L, H, 3H)
    params["wo"] = jnp.stack(wo_l).astype(jnp.bfloat16)          # (L, H, H)
    params["w1"] = jnp.stack(w1_l).astype(jnp.bfloat16)          # (L, H, FF)
    params["w2"] = jnp.stack(w2_l).astype(jnp.bfloat16)          # (L, FF, H)
    params["vecs"] = jnp.stack(vec_l)                            # (L, NVR, FF) f32

    # misc slab: [emb LN gamma, emb LN beta, pooler bias, classifier bias (padded)]
    params["misc_vec"] = jnp.zeros((NMR, H), jnp.float32).at[M_EG].set(1.0)
    params["pool_w"] = w(H, H).astype(jnp.bfloat16)              # bert.pooler.dense (H -> H)
    cls_w = w(H, C)                                              # self.classifier (H -> C)
    params["cls_w"] = (jnp.zeros((H, CP), jnp.float32)
                       .at[:, :C].set(cls_w).astype(jnp.bfloat16))  # padded, extra cols zero
    return params


# ----------------------------- main -----------------------------
if __name__ == "__main__":
    key = jax.random.PRNGKey(0)
    pkey, ikey = jax.random.split(key)
    params = init_params(pkey)

    input_ids = jax.random.randint(ikey, (B, S), 0, V, dtype=jnp.int32)
    attention_mask = jnp.concatenate(
        [jnp.ones((B, S - 2), jnp.int32), jnp.zeros((B, 2), jnp.int32)], axis=1)
    token_type_ids = jnp.zeros((B, S), jnp.int32)

    fwd = jax.jit(faithful_bert_classifier_forward)
    logits = fwd(params, input_ids, attention_mask, token_type_ids)
    jax.block_until_ready(logits)

    assert logits.shape == (B, C) and logits.dtype == jnp.float32
    assert bool(jnp.all(jnp.isfinite(logits)))
    print("KERNEL_OK")
</pallas_src>

<mosaic_0001>
module attributes {stable_mosaic.version = 11 : i64} {
  func.func @fused_bert_kernel(%arg0: i32, %arg1: memref<2x8x128xf32, #tpu.memory_space<vmem>>, %arg2: memref<2x1x8xf32, #tpu.memory_space<vmem>>, %arg3: memref<8x128xf32, #tpu.memory_space<vmem>>, %arg4: memref<128x128xbf16, #tpu.memory_space<vmem>>, %arg5: memref<128x128xbf16, #tpu.memory_space<vmem>>, %arg6: memref<1x128x384xbf16, #tpu.memory_space<vmem>>, %arg7: memref<1x128x128xbf16, #tpu.memory_space<vmem>>, %arg8: memref<1x128x256xbf16, #tpu.memory_space<vmem>>, %arg9: memref<1x256x128xbf16, #tpu.memory_space<vmem>>, %arg10: memref<1x16x256xf32, #tpu.memory_space<vmem>>, %arg11: memref<2x128xf32, #tpu.memory_space<vmem>>, %arg12: memref<16x128xf32, #tpu.memory_space<vmem>>) attributes {dimension_semantics = [#tpu.dimension_semantics<arbitrary>], iteration_bounds = array<i64: 2>, scalar_prefetch = 0 : i64, scratch_operands = 1 : i64, tpu.core_type = #tpu.core_type<tc>, window_params = [{pipeline_mode = #tpu.pipeline_mode<synchronous>, transform_indices = @transform_0, window_bounds = array<i64: 2, 8, 128>}, {pipeline_mode = #tpu.pipeline_mode<synchronous>, transform_indices = @transform_1, window_bounds = array<i64: 2, 1, 8>}, {pipeline_mode = #tpu.pipeline_mode<synchronous>, transform_indices = @transform_2, window_bounds = array<i64: 8, 128>}, {pipeline_mode = #tpu.pipeline_mode<synchronous>, transform_indices = @transform_3, window_bounds = array<i64: 128, 128>}, {pipeline_mode = #tpu.pipeline_mode<synchronous>, transform_indices = @transform_4, window_bounds = array<i64: 128, 128>}, {transform_indices = @transform_5, window_bounds = array<i64: 1, 128, 384>}, {transform_indices = @transform_6, window_bounds = array<i64: 1, 128, 128>}, {transform_indices = @transform_7, window_bounds = array<i64: 1, 128, 256>}, {transform_indices = @transform_8, window_bounds = array<i64: 1, 256, 128>}, {transform_indices = @transform_9, window_bounds = array<i64: 1, 16, 256>}, {pipeline_mode = #tpu.pipeline_mode<synchronous>, transform_indices = @transform_10, window_bounds = array<i64: 2, 128>}]} {
    %c0_i32 = arith.constant 0 : i32
    %0 = arith.cmpi eq, %arg0, %c0_i32 : i32
    %1 = arith.extui %0 : i1 to i32
    %c0_i32_0 = arith.constant 0 : i32
    %2 = arith.cmpi ne, %1, %c0_i32_0 : i32
    scf.if %2 {
      %c0_71 = arith.constant 0 : index
      %c0_72 = arith.constant 0 : index
      %172 = vector.load %arg3[%c0_71, %c0_72] : memref<8x128xf32, #tpu.memory_space<vmem>>, vector<1x128xf32>
      %c1_73 = arith.constant 1 : index
      %c0_74 = arith.constant 0 : index
      %173 = vector.load %arg3[%c1_73, %c0_74] : memref<8x128xf32, #tpu.memory_space<vmem>>, vector<1x128xf32>
      %c0_75 = arith.constant 0 : index
      %c0_76 = arith.constant 0 : index
      %c0_77 = arith.constant 0 : index
      %174 = vector.load %arg1[%c0_75, %c0_76, %c0_77] : memref<2x8x128xf32, #tpu.memory_space<vmem>>, vector<2x8x128xf32>
      %175 = vector.shape_cast %174 : vector<2x8x128xf32> to vector<16x128xf32>
      %cst_78 = arith.constant dense<0.000000e+00> : vector<16xf32>
      %176 = vector.multi_reduction <add>, %175, %cst_78 [1] : vector<16x128xf32> to vector<16xf32>
      %177 = vector.shape_cast %176 : vector<16xf32> to vector<16x1xf32>
      %cst_79 = arith.constant 1.280000e+02 : f32
      %178 = vector.broadcast %cst_79 : f32 to vector<16x1xf32>
      %179 = arith.divf %177, %178 : vector<16x1xf32>
      %180 = vector.broadcast %179 : vector<16x1xf32> to vector<16x128xf32>
      %181 = arith.subf %175, %180 : vector<16x128xf32>
      %182 = arith.mulf %181, %181 : vector<16x128xf32>
      %cst_80 = arith.constant dense<0.000000e+00> : vector<16xf32>
      %183 = vector.multi_reduction <add>, %182, %cst_80 [1] : vector<16x128xf32> to vector<16xf32>
      %184 = vector.shape_cast %183 : vector<16xf32> to vector<16x1xf32>
      %cst_81 = arith.constant 1.280000e+02 : f32
      %185 = vector.broadcast %cst_81 : f32 to vector<16x1xf32>
      %186 = arith.divf %184, %185 : vector<16x1xf32>
      %187 = vector.broadcast %179 : vector<16x1xf32> to vector<16x128xf32>
      %188 = arith.subf %175, %187 : vector<16x128xf32>
      %cst_82 = arith.constant 9.99999996E-13 : f32
      %189 = vector.broadcast %cst_82 : f32 to vector<16x1xf32>
      %190 = arith.addf %186, %189 : vector<16x1xf32>
      %191 = math.rsqrt %190 : vector<16x1xf32>
      %192 = vector.broadcast %191 : vector<16x1xf32> to vector<16x128xf32>
      %193 = arith.mulf %188, %192 : vector<16x128xf32>
      %194 = vector.broadcast %172 : vector<1x128xf32> to vector<16x128xf32>
      %195 = arith.mulf %193, %194 : vector<16x128xf32>
      %196 = vector.broadcast %173 : vector<1x128xf32> to vector<16x128xf32>
      %197 = arith.addf %195, %196 : vector<16x128xf32>
      %c0_83 = arith.constant 0 : index
      %c0_84 = arith.constant 0 : index
      %198 = vector.load %arg12[%c0_83, %c0_84] : memref<16x128xf32, #tpu.memory_space<vmem>>, vector<16x128xf32>
      tpu.vector_store %arg12[%c0_83, %c0_84], %197 {strides = array<i32>} : memref<16x128xf32, #tpu.memory_space<vmem>>, vector<16x128xf32>,
    } else {
    }
    %c0 = arith.constant 0 : index
    %c0_1 = arith.constant 0 : index
    %3 = vector.load %arg12[%c0, %c0_1] : memref<16x128xf32, #tpu.memory_space<vmem>>, vector<16x128xf32>
    %4 = arith.truncf %3 : vector<16x128xf32> to vector<16x128xbf16>
    %c0_2 = arith.constant 0 : index
    %c0_3 = arith.constant 0 : index
    %c0_4 = arith.constant 0 : index
    %5 = vector.load %arg10[%c0_2, %c0_3, %c0_4] : memref<1x16x256xf32, #tpu.memory_space<vmem>>, vector<1x1x128xf32>
    %6 = vector.shape_cast %5 : vector<1x1x128xf32> to vector<1x128xf32>
    %c0_5 = arith.constant 0 : index
    %c1 = arith.constant 1 : index
    %c0_6 = arith.constant 0 : index
    %7 = vector.load %arg10[%c0_5, %c1, %c0_6] : memref<1x16x256xf32, #tpu.memory_space<vmem>>, vector<1x1x128xf32>
    %8 = vector.shape_cast %7 : vector<1x1x128xf32> to vector<1x128xf32>
    %c0_7 = arith.constant 0 : index
    %c2 = arith.constant 2 : index
    %c0_8 = arith.constant 0 : index
    %9 = vector.load %arg10[%c0_7, %c2, %c0_8] : memref<1x16x256xf32, #tpu.memory_space<vmem>>, vector<1x1x128xf32>
    %10 = vector.shape_cast %9 : vector<1x1x128xf32> to vector<1x128xf32>
    %c0_9 = arith.constant 0 : index
    %c3 = arith.constant 3 : index
    %c0_10 = arith.constant 0 : index
    %11 = vector.load %arg10[%c0_9, %c3, %c0_10] : memref<1x16x256xf32, #tpu.memory_space<vmem>>, vector<1x1x128xf32>
    %12 = vector.shape_cast %11 : vector<1x1x128xf32> to vector<1x128xf32>
    %c0_11 = arith.constant 0 : index
    %c4 = arith.constant 4 : index
    %c0_12 = arith.constant 0 : index
    %13 = vector.load %arg10[%c0_11, %c4, %c0_12] : memref<1x16x256xf32, #tpu.memory_space<vmem>>, vector<1x1x256xf32>
    %14 = vector.shape_cast %13 : vector<1x1x256xf32> to vector<1x256xf32>
    %c0_13 = arith.constant 0 : index
    %c5 = arith.constant 5 : index
    %c0_14 = arith.constant 0 : index
    %15 = vector.load %arg10[%c0_13, %c5, %c0_14] : memref<1x16x256xf32, #tpu.memory_space<vmem>>, vector<1x1x128xf32>
    %16 = vector.shape_cast %15 : vector<1x1x128xf32> to vector<1x128xf32>
    %c0_15 = arith.constant 0 : index
    %c6 = arith.constant 6 : index
    %c0_16 = arith.constant 0 : index
    %17 = vector.load %arg10[%c0_15, %c6, %c0_16] : memref<1x16x256xf32, #tpu.memory_space<vmem>>, vector<1x1x128xf32>
    %18 = vector.shape_cast %17 : vector<1x1x128xf32> to vector<1x128xf32>
    %c0_17 = arith.constant 0 : index
    %c7 = arith.constant 7 : index
    %c0_18 = arith.constant 0 : index
    %19 = vector.load %arg10[%c0_17, %c7, %c0_18] : memref<1x16x256xf32, #tpu.memory_space<vmem>>, vector<1x1x128xf32>
    %20 = vector.shape_cast %19 : vector<1x1x128xf32> to vector<1x128xf32>
    %c0_19 = arith.constant 0 : index
    %c8 = arith.constant 8 : index
    %c0_20 = arith.constant 0 : index
    %21 = vector.load %arg10[%c0_19, %c8, %c0_20] : memref<1x16x256xf32, #tpu.memory_space<vmem>>, vector<1x1x128xf32>
    %22 = vector.shape_cast %21 : vector<1x1x128xf32> to vector<1x128xf32>
    %c0_21 = arith.constant 0 : index
    %c9 = arith.constant 9 : index
    %c0_22 = arith.constant 0 : index
    %23 = vector.load %arg10[%c0_21, %c9, %c0_22] : memref<1x16x256xf32, #tpu.memory_space<vmem>>, vector<1x1x128xf32>
    %24 = vector.shape_cast %23 : vector<1x1x128xf32> to vector<1x128xf32>
    %c0_23 = arith.constant 0 : index
    %c0_24 = arith.constant 0 : index
    %c0_25 = arith.constant 0 : index
    %25 = vector.load %arg6[%c0_23, %c0_24, %c0_25] : memref<1x128x384xbf16, #tpu.memory_space<vmem>>, vector<1x128x384xbf16>
    %26 = vector.shape_cast %25 : vector<1x128x384xbf16> to vector<128x384xbf16>
    %cst = arith.constant dense<0.000000e+00> : vector<16x384xf32>
    %27 = tpu.matmul %4, %26, %cst {dimension_numbers = #tpu.dot_dimension_numbers<[1], [0], [0], [1], [0, 0, 1, 1], [], []>} : vector<16x128xbf16>, vector<128x384xbf16>, vector<16x384xf32> -> vector<16x384xf32>
    %28 = vector.extract_strided_slice %27 {offsets = [0, 0], sizes = [16, 128], strides = [1, 1]} : vector<16x384xf32> to vector<16x128xf32>
    %29 = vector.broadcast %6 : vector<1x128xf32> to vector<16x128xf32>
    %30 = arith.addf %28, %29 : vector<16x128xf32>
    %cst_26 = arith.constant 1.250000e-01 : f32
    %31 = vector.broadcast %cst_26 : f32 to vector<16x128xf32>
    %32 = arith.mulf %30, %31 : vector<16x128xf32>
    %33 = vector.shape_cast %32 : vector<16x128xf32> to vector<2x8x128xf32>
    %34 = arith.truncf %33 : vector<2x8x128xf32> to vector<2x8x128xbf16>
    %35 = vector.extract_strided_slice %27 {offsets = [0, 128], sizes = [16, 128], strides = [1, 1]} : vector<16x384xf32> to vector<16x128xf32>
    %36 = vector.broadcast %8 : vector<1x128xf32> to vector<16x128xf32>
    %37 = arith.addf %35, %36 : vector<16x128xf32>
    %38 = vector.shape_cast %37 : vector<16x128xf32> to vector<2x8x128xf32>
    %39 = arith.truncf %38 : vector<2x8x128xf32> to vector<2x8x128xbf16>
    %40 = vector.extract_strided_slice %27 {offsets = [0, 256], sizes = [16, 128], strides = [1, 1]} : vector<16x384xf32> to vector<16x128xf32>
    %41 = vector.broadcast %10 : vector<1x128xf32> to vector<16x128xf32>
    %42 = arith.addf %40, %41 : vector<16x128xf32>
    %43 = vector.shape_cast %42 : vector<16x128xf32> to vector<2x8x128xf32>
    %44 = arith.truncf %43 : vector<2x8x128xf32> to vector<2x8x128xbf16>
    %c0_27 = arith.constant 0 : index
    %c0_28 = arith.constant 0 : index
    %c0_29 = arith.constant 0 : index
    %45 = vector.load %arg2[%c0_27, %c0_28, %c0_29] : memref<2x1x8xf32, #tpu.memory_space<vmem>>, vector<2x1x8xf32>
    %46 = vector.shape_cast %45 : vector<2x1x8xf32> to vector<2x1x8xf32>
    %47 = vector.broadcast %46 : vector<2x1x8xf32> to vector<2x8x8xf32>
    %cst_30 = arith.constant 0.000000e+00 : f32
    %48 = vector.broadcast %cst_30 : f32 to vector<16x128xf32>
    %49 = vector.extract_strided_slice %34 {offsets = [0, 0, 0], sizes = [2, 8, 64], strides = [1, 1, 1]} : vector<2x8x128xbf16> to vector<2x8x64xbf16>
    %50 = vector.extract_strided_slice %39 {offsets = [0, 0, 0], sizes = [2, 8, 64], strides = [1, 1, 1]} : vector<2x8x128xbf16> to vector<2x8x64xbf16>
    "tpu.trace_start"() <{level = 10 : i32, message = "bqd,bkd->bqk"}> : () -> ()
    %cst_31 = arith.constant dense<0.000000e+00> : vector<2x8x8xf32>
    %51 = tpu.matmul %49, %50, %cst_31 {dimension_numbers = #tpu.dot_dimension_numbers<[2], [2], [1], [1], [0, 0, 0, 1, 1, 1], [0], [0]>} : vector<2x8x64xbf16>, vector<2x8x64xbf16>, vector<2x8x8xf32> -> vector<2x8x8xf32>
    "tpu.trace_stop"() : () -> ()
    %52 = arith.addf %51, %47 : vector<2x8x8xf32>
    %cst_32 = arith.constant dense<0xFF800000> : vector<2x8xf32>
    %53 = vector.multi_reduction <maximumf>, %52, %cst_32 [2] : vector<2x8x8xf32> to vector<2x8xf32>
    %54 = vector.shape_cast %53 : vector<2x8xf32> to vector<2x8x1xf32>
    %55 = vector.broadcast %54 : vector<2x8x1xf32> to vector<2x8x8xf32>
    %56 = arith.subf %52, %55 : vector<2x8x8xf32>
    %57 = math.exp %56 : vector<2x8x8xf32>
    %cst_33 = arith.constant dense<0.000000e+00> : vector<2x8xf32>
    %58 = vector.multi_reduction <add>, %57, %cst_33 [2] : vector<2x8x8xf32> to vector<2x8xf32>
    %59 = vector.shape_cast %58 : vector<2x8xf32> to vector<2x8x1xf32>
    %60 = tpu.reciprocal %59 {approx = true} : vector<2x8x1xf32> -> vector<2x8x1xf32>
    %61 = vector.broadcast %60 : vector<2x8x1xf32> to vector<2x8x8xf32>
    %62 = arith.mulf %57, %61 : vector<2x8x8xf32>
    %63 = arith.truncf %62 : vector<2x8x8xf32> to vector<2x8x8xbf16>
    %64 = vector.extract_strided_slice %44 {offsets = [0, 0, 0], sizes = [2, 8, 64], strides = [1, 1, 1]} : vector<2x8x128xbf16> to vector<2x8x64xbf16>
    "tpu.trace_start"() <{level = 10 : i32, message = "bqk,bkd->bqd"}> : () -> ()
    %cst_34 = arith.constant dense<0.000000e+00> : vector<2x8x64xf32>
    %65 = tpu.matmul %63, %64, %cst_34 {dimension_numbers = #tpu.dot_dimension_numbers<[2], [1], [1], [2], [0, 0, 0, 1, 1, 2], [0], [0]>} : vector<2x8x8xbf16>, vector<2x8x64xbf16>, vector<2x8x64xf32> -> vector<2x8x64xf32>
    "tpu.trace_stop"() : () -> ()
    %66 = vector.shape_cast %65 : vector<2x8x64xf32> to vector<16x64xf32>
    %67 = arith.truncf %66 : vector<16x64xf32> to vector<16x64xbf16>
    %c0_35 = arith.constant 0 : index
    %c0_36 = arith.constant 0 : index
    %c0_37 = arith.constant 0 : index
    %68 = vector.load %arg7[%c0_35, %c0_36, %c0_37] : memref<1x128x128xbf16, #tpu.memory_space<vmem>>, vector<1x64x128xbf16>
    %69 = vector.shape_cast %68 : vector<1x64x128xbf16> to vector<64x128xbf16>
    %cst_38 = arith.constant dense<0.000000e+00> : vector<16x128xf32>
    %70 = tpu.matmul %67, %69, %cst_38 {dimension_numbers = #tpu.dot_dimension_numbers<[1], [0], [0], [1], [0, 0, 1, 1], [], []>} : vector<16x64xbf16>, vector<64x128xbf16>, vector<16x128xf32> -> vector<16x128xf32>
    %71 = arith.addf %48, %70 : vector<16x128xf32>
    %72 = vector.extract_strided_slice %34 {offsets = [0, 0, 64], sizes = [2, 8, 64], strides = [1, 1, 1]} : vector<2x8x128xbf16> to vector<2x8x64xbf16>
    %73 = vector.extract_strided_slice %39 {offsets = [0, 0, 64], sizes = [2, 8, 64], strides = [1, 1, 1]} : vector<2x8x128xbf16> to vector<2x8x64xbf16>
    "tpu.trace_start"() <{level = 10 : i32, message = "bqd,bkd->bqk"}> : () -> ()
    %cst_39 = arith.constant dense<0.000000e+00> : vector<2x8x8xf32>
    %74 = tpu.matmul %72, %73, %cst_39 {dimension_numbers = #tpu.dot_dimension_numbers<[2], [2], [1], [1], [0, 0, 0, 1, 1, 1], [0], [0]>} : vector<2x8x64xbf16>, vector<2x8x64xbf16>, vector<2x8x8xf32> -> vector<2x8x8xf32>
    "tpu.trace_stop"() : () -> ()
    %75 = arith.addf %74, %47 : vector<2x8x8xf32>
    %cst_40 = arith.constant dense<0xFF800000> : vector<2x8xf32>
    %76 = vector.multi_reduction <maximumf>, %75, %cst_40 [2] : vector<2x8x8xf32> to vector<2x8xf32>
    %77 = vector.shape_cast %76 : vector<2x8xf32> to vector<2x8x1xf32>
    %78 = vector.broadcast %77 : vector<2x8x1xf32> to vector<2x8x8xf32>
    %79 = arith.subf %75, %78 : vector<2x8x8xf32>
    %80 = math.exp %79 : vector<2x8x8xf32>
    %cst_41 = arith.constant dense<0.000000e+00> : vector<2x8xf32>
    %81 = vector.multi_reduction <add>, %80, %cst_41 [2] : vector<2x8x8xf32> to vector<2x8xf32>
    %82 = vector.shape_cast %81 : vector<2x8xf32> to vector<2x8x1xf32>
    %83 = tpu.reciprocal %82 {approx = true} : vector<2x8x1xf32> -> vector<2x8x1xf32>
    %84 = vector.broadcast %83 : vector<2x8x1xf32> to vector<2x8x8xf32>
    %85 = arith.mulf %80, %84 : vector<2x8x8xf32>
    %86 = arith.truncf %85 : vector<2x8x8xf32> to vector<2x8x8xbf16>
    %87 = vector.extract_strided_slice %44 {offsets = [0, 0, 64], sizes = [2, 8, 64], strides = [1, 1, 1]} : vector<2x8x128xbf16> to vector<2x8x64xbf16>
    "tpu.trace_start"() <{level = 10 : i32, message = "bqk,bkd->bqd"}> : () -> ()
    %cst_42 = arith.constant dense<0.000000e+00> : vector<2x8x64xf32>
    %88 = tpu.matmul %86, %87, %cst_42 {dimension_numbers = #tpu.dot_dimension_numbers<[2], [1], [1], [2], [0, 0, 0, 1, 1, 2], [0], [0]>} : vector<2x8x8xbf16>, vector<2x8x64xbf16>, vector<2x8x64xf32> -> vector<2x8x64xf32>
    "tpu.trace_stop"() : () -> ()
    %89 = vector.shape_cast %88 : vector<2x8x64xf32> to vector<16x64xf32>
    %90 = arith.truncf %89 : vector<16x64xf32> to vector<16x64xbf16>
    %c0_43 = arith.constant 0 : index
    %c64 = arith.constant 64 : index
    %c0_44 = arith.constant 0 : index
    %91 = vector.load %arg7[%c0_43, %c64, %c0_44] : memref<1x128x128xbf16, #tpu.memory_space<vmem>>, vector<1x64x128xbf16>
    %92 = vector.shape_cast %91 : vector<1x64x128xbf16> to vector<64x128xbf16>
    %cst_45 = arith.constant dense<0.000000e+00> : vector<16x128xf32>
    %93 = tpu.matmul %90, %92, %cst_45 {dimension_numbers = #tpu.dot_dimension_numbers<[1], [0], [0], [1], [0, 0, 1, 1], [], []>} : vector<16x64xbf16>, vector<64x128xbf16>, vector<16x128xf32> -> vector<16x128xf32>
    %94 = arith.addf %71, %93 : vector<16x128xf32>
    %95 = vector.broadcast %12 : vector<1x128xf32> to vector<16x128xf32>
    %96 = arith.addf %94, %95 : vector<16x128xf32>
    %97 = arith.addf %3, %96 : vector<16x128xf32>
    %cst_46 = arith.constant dense<0.000000e+00> : vector<16xf32>
    %98 = vector.multi_reduction <add>, %97, %cst_46 [1] : vector<16x128xf32> to vector<16xf32>
    %99 = vector.shape_cast %98 : vector<16xf32> to vector<16x1xf32>
    %cst_47 = arith.constant 1.280000e+02 : f32
    %100 = vector.broadcast %cst_47 : f32 to vector<16x1xf32>
    %101 = arith.divf %99, %100 : vector<16x1xf32>
    %102 = vector.broadcast %101 : vector<16x1xf32> to vector<16x128xf32>
    %103 = arith.subf %97, %102 : vector<16x128xf32>
    %104 = arith.mulf %103, %103 : vector<16x128xf32>
    %cst_48 = arith.constant dense<0.000000e+00> : vector<16xf32>
    %105 = vector.multi_reduction <add>, %104, %cst_48 [1] : vector<16x128xf32> to vector<16xf32>
    %106 = vector.shape_cast %105 : vector<16xf32> to vector<16x1xf32>
    %cst_49 = arith.constant 1.280000e+02 : f32
    %107 = vector.broadcast %cst_49 : f32 to vector<16x1xf32>
    %108 = arith.divf %106, %107 : vector<16x1xf32>
    %109 = vector.broadcast %101 : vector<16x1xf32> to vector<16x128xf32>
    %110 = arith.subf %97, %109 : vector<16x128xf32>
    %cst_50 = arith.constant 9.99999996E-13 : f32
    %111 = vector.broadcast %cst_50 : f32 to vector<16x1xf32>
    %112 = arith.addf %108, %111 : vector<16x1xf32>
    %113 = math.rsqrt %112 : vector<16x1xf32>
    %114 = vector.broadcast %113 : vector<16x1xf32> to vector<16x128xf32>
    %115 = arith.mulf %110, %114 : vector<16x128xf32>
    %116 = vector.broadcast %18 : vector<1x128xf32> to vector<16x128xf32>
    %117 = arith.mulf %115, %116 : vector<16x128xf32>
    %118 = vector.broadcast %20 : vector<1x128xf32> to vector<16x128xf32>
    %119 = arith.addf %117, %118 : vector<16x128xf32>
    %120 = arith.truncf %119 : vector<16x128xf32> to vector<16x128xbf16>
    %c0_51 = arith.constant 0 : index
    %c0_52 = arith.constant 0 : index
    %c0_53 = arith.constant 0 : index
    %121 = vector.load %arg8[%c0_51, %c0_52, %c0_53] : memref<1x128x256xbf16, #tpu.memory_space<vmem>>, vector<1x128x256xbf16>
    %122 = vector.shape_cast %121 : vector<1x128x256xbf16> to vector<128x256xbf16>
    %cst_54 = arith.constant dense<0.000000e+00> : vector<16x256xf32>
    %123 = tpu.matmul %120, %122, %cst_54 {dimension_numbers = #tpu.dot_dimension_numbers<[1], [0], [0], [1], [0, 0, 1, 1], [], []>} : vector<16x128xbf16>, vector<128x256xbf16>, vector<16x256xf32> -> vector<16x256xf32>
    %124 = vector.broadcast %14 : vector<1x256xf32> to vector<16x256xf32>
    %125 = arith.addf %123, %124 : vector<16x256xf32>
    %cst_55 = arith.constant 5.000000e-01 : f32
    %126 = vector.broadcast %cst_55 : f32 to vector<16x256xf32>
    %127 = arith.mulf %126, %125 : vector<16x256xf32>
    %cst_56 = arith.constant 4.471500e-02 : f32
    %128 = vector.broadcast %cst_56 : f32 to vector<16x256xf32>
    %129 = arith.mulf %128, %125 : vector<16x256xf32>
    %130 = arith.mulf %129, %125 : vector<16x256xf32>
    %131 = arith.mulf %130, %125 : vector<16x256xf32>
    %132 = arith.addf %125, %131 : vector<16x256xf32>
    %cst_57 = arith.constant 0.797884583 : f32
    %133 = vector.broadcast %cst_57 : f32 to vector<16x256xf32>
    %134 = arith.mulf %133, %132 : vector<16x256xf32>
    %135 = math.tanh %134 : vector<16x256xf32>
    %cst_58 = arith.constant 1.000000e+00 : f32
    %136 = vector.broadcast %cst_58 : f32 to vector<16x256xf32>
    %137 = arith.addf %136, %135 : vector<16x256xf32>
    %138 = arith.mulf %127, %137 : vector<16x256xf32>
    %139 = arith.truncf %138 : vector<16x256xf32> to vector<16x256xbf16>
    %c0_59 = arith.constant 0 : index
    %c0_60 = arith.constant 0 : index
    %c0_61 = arith.constant 0 : index
    %140 = vector.load %arg9[%c0_59, %c0_60, %c0_61] : memref<1x256x128xbf16, #tpu.memory_space<vmem>>, vector<1x256x128xbf16>
    %141 = vector.shape_cast %140 : vector<1x256x128xbf16> to vector<256x128xbf16>
    %cst_62 = arith.constant dense<0.000000e+00> : vector<16x128xf32>
    %142 = tpu.matmul %139, %141, %cst_62 {dimension_numbers = #tpu.dot_dimension_numbers<[1], [0], [0], [1], [0, 0, 1, 1], [], []>} : vector<16x256xbf16>, vector<256x128xbf16>, vector<16x128xf32> -> vector<16x128xf32>
    %143 = vector.broadcast %16 : vector<1x128xf32> to vector<16x128xf32>
    %144 = arith.addf %142, %143 : vector<16x128xf32>
    %145 = arith.addf %119, %144 : vector<16x128xf32>
    %cst_63 = arith.constant dense<0.000000e+00> : vector<16xf32>
    %146 = vector.multi_reduction <add>, %145, %cst_63 [1] : vector<16x128xf32> to vector<16xf32>
    %147 = vector.shape_cast %146 : vector<16xf32> to vector<16x1xf32>
    %cst_64 = arith.constant 1.280000e+02 : f32
    %148 = vector.broadcast %cst_64 : f32 to vector<16x1xf32>
    %149 = arith.divf %147, %148 : vector<16x1xf32>
    %150 = vector.broadcast %149 : vector<16x1xf32> to vector<16x128xf32>
    %151 = arith.subf %145, %150 : vector<16x128xf32>
    %152 = arith.mulf %151, %151 : vector<16x128xf32>
    %cst_65 = arith.constant dense<0.000000e+00> : vector<16xf32>
    %153 = vector.multi_reduction <add>, %152, %cst_65 [1] : vector<16x128xf32> to vector<16xf32>
    %154 = vector.shape_cast %153 : vector<16xf32> to vector<16x1xf32>
    %cst_66 = arith.constant 1.280000e+02 : f32
    %155 = vector.broadcast %cst_66 : f32 to vector<16x1xf32>
    %156 = arith.divf %154, %155 : vector<16x1xf32>
    %157 = vector.broadcast %149 : vector<16x1xf32> to vector<16x128xf32>
    %158 = arith.subf %145, %157 : vector<16x128xf32>
    %cst_67 = arith.constant 9.99999996E-13 : f32
    %159 = vector.broadcast %cst_67 : f32 to vector<16x1xf32>
    %160 = arith.addf %156, %159 : vector<16x1xf32>
    %161 = math.rsqrt %160 : vector<16x1xf32>
    %162 = vector.broadcast %161 : vector<16x1xf32> to vector<16x128xf32>
    %163 = arith.mulf %158, %162 : vector<16x128xf32>
    %164 = vector.broadcast %22 : vector<1x128xf32> to vector<16x128xf32>
    %165 = arith.mulf %163, %164 : vector<16x128xf32>
    %166 = vector.broadcast %24 : vector<1x128xf32> to vector<16x128xf32>
    %167 = arith.addf %165, %166 : vector<16x128xf32>
    %c0_68 = arith.constant 0 : index
    %c0_69 = arith.constant 0 : index
    %168 = vector.load %arg12[%c0_68, %c0_69] : memref<16x128xf32, #tpu.memory_space<vmem>>, vector<16x128xf32>
    tpu.vector_store %arg12[%c0_68, %c0_69], %167 {strides = array<i32>} : memref<16x128xf32, #tpu.memory_space<vmem>>, vector<16x128xf32>,
    %c1_i32 = arith.constant 1 : i32
    %169 = arith.cmpi eq, %arg0, %c1_i32 : i32
    %170 = arith.extui %169 : i1 to i32
    %c0_i32_70 = arith.constant 0 : i32
    %171 = arith.cmpi ne, %170, %c0_i32_70 : i32
    scf.if %171 {
      %172 = vector.shape_cast %167 : vector<16x128xf32> to vector<2x8x128xf32>
      %173 = vector.extract_strided_slice %172 {offsets = [0, 0, 0], sizes = [2, 1, 128], strides = [1, 1, 1]} : vector<2x8x128xf32> to vector<2x1x128xf32>
      %174 = vector.shape_cast %173 : vector<2x1x128xf32> to vector<2x128xf32>
      %175 = arith.truncf %174 : vector<2x128xf32> to vector<2x128xbf16>
      %c0_71 = arith.constant 0 : index
      %c0_72 = arith.constant 0 : index
      %176 = vector.load %arg4[%c0_71, %c0_72] : memref<128x128xbf16, #tpu.memory_space<vmem>>, vector<128x128xbf16>
      %cst_73 = arith.constant dense<0.000000e+00> : vector<2x128xf32>
      %177 = tpu.matmul %175, %176, %cst_73 {dimension_numbers = #tpu.dot_dimension_numbers<[1], [0], [0], [1], [0, 0, 1, 1], [], []>} : vector<2x128xbf16>, vector<128x128xbf16>, vector<2x128xf32> -> vector<2x128xf32>
      %c2_74 = arith.constant 2 : index
      %c0_75 = arith.constant 0 : index
      %178 = vector.load %arg3[%c2_74, %c0_75] : memref<8x128xf32, #tpu.memory_space<vmem>>, vector<1x128xf32>
      %179 = vector.broadcast %178 : vector<1x128xf32> to vector<2x128xf32>
      %180 = arith.addf %177, %179 : vector<2x128xf32>
      %181 = math.tanh %180 : vector<2x128xf32>
      %182 = arith.truncf %181 : vector<2x128xf32> to vector<2x128xbf16>
      %c0_76 = arith.constant 0 : index
      %c0_77 = arith.constant 0 : index
      %183 = vector.load %arg5[%c0_76, %c0_77] : memref<128x128xbf16, #tpu.memory_space<vmem>>, vector<128x128xbf16>
      %cst_78 = arith.constant dense<0.000000e+00> : vector<2x128xf32>
      %184 = tpu.matmul %182, %183, %cst_78 {dimension_numbers = #tpu.dot_dimension_numbers<[1], [0], [0], [1], [0, 0, 1, 1], [], []>} : vector<2x128xbf16>, vector<128x128xbf16>, vector<2x128xf32> -> vector<2x128xf32>
      %c3_79 = arith.constant 3 : index
      %c0_80 = arith.constant 0 : index
      %185 = vector.load %arg3[%c3_79, %c0_80] : memref<8x128xf32, #tpu.memory_space<vmem>>, vector<1x128xf32>
      %186 = vector.broadcast %185 : vector<1x128xf32> to vector<2x128xf32>
      %187 = arith.addf %184, %186 : vector<2x128xf32>
      %c0_81 = arith.constant 0 : index
      %c0_82 = arith.constant 0 : index
      %188 = vector.load %arg11[%c0_81, %c0_82] : memref<2x128xf32, #tpu.memory_space<vmem>>, vector<2x128xf32>
      tpu.vector_store %arg11[%c0_81, %c0_82], %187 {strides = array<i32>} : memref<2x128xf32, #tpu.memory_space<vmem>>, vector<2x128xf32>,
    } else {
    }
    return
  }
  func.func @transform_0(%arg0: i32) -> (i32, i32, i32) {
    %c0_i32 = arith.constant 0 : i32
    %c0_i32_0 = arith.constant 0 : i32
    %c0_i32_1 = arith.constant 0 : i32
    %c0_i32_2 = arith.constant 0 : i32
    return %c0_i32, %c0_i32_0, %c0_i32_1 : i32, i32, i32
  }
  func.func @transform_1(%arg0: i32) -> (i32, i32, i32) {
    %c0_i32 = arith.constant 0 : i32
    %c0_i32_0 = arith.constant 0 : i32
    %c0_i32_1 = arith.constant 0 : i32
    %c0_i32_2 = arith.constant 0 : i32
    return %c0_i32, %c0_i32_0, %c0_i32_1 : i32, i32, i32
  }
  func.func @transform_2(%arg0: i32) -> (i32, i32) {
    %c0_i32 = arith.constant 0 : i32
    %c0_i32_0 = arith.constant 0 : i32
    %c0_i32_1 = arith.constant 0 : i32
    return %c0_i32, %c0_i32_0 : i32, i32
  }
  func.func @transform_3(%arg0: i32) -> (i32, i32) {
    %c0_i32 = arith.constant 0 : i32
    %c0_i32_0 = arith.constant 0 : i32
    %c0_i32_1 = arith.constant 0 : i32
    return %c0_i32, %c0_i32_0 : i32, i32
  }
  func.func @transform_4(%arg0: i32) -> (i32, i32) {
    %c0_i32 = arith.constant 0 : i32
    %c0_i32_0 = arith.constant 0 : i32
    %c0_i32_1 = arith.constant 0 : i32
    return %c0_i32, %c0_i32_0 : i32, i32
  }
  func.func @transform_5(%arg0: i32) -> (i32, i32, i32) {
    %c0_i32 = arith.constant 0 : i32
    %c0_i32_0 = arith.constant 0 : i32
    %c0_i32_1 = arith.constant 0 : i32
    return %arg0, %c0_i32, %c0_i32_0 : i32, i32, i32
  }
  func.func @transform_6(%arg0: i32) -> (i32, i32, i32) {
    %c0_i32 = arith.constant 0 : i32
    %c0_i32_0 = arith.constant 0 : i32
    %c0_i32_1 = arith.constant 0 : i32
    return %arg0, %c0_i32, %c0_i32_0 : i32, i32, i32
  }
  func.func @transform_7(%arg0: i32) -> (i32, i32, i32) {
    %c0_i32 = arith.constant 0 : i32
    %c0_i32_0 = arith.constant 0 : i32
    %c0_i32_1 = arith.constant 0 : i32
    return %arg0, %c0_i32, %c0_i32_0 : i32, i32, i32
  }
  func.func @transform_8(%arg0: i32) -> (i32, i32, i32) {
    %c0_i32 = arith.constant 0 : i32
    %c0_i32_0 = arith.constant 0 : i32
    %c0_i32_1 = arith.constant 0 : i32
    return %arg0, %c0_i32, %c0_i32_0 : i32, i32, i32
  }
  func.func @transform_9(%arg0: i32) -> (i32, i32, i32) {
    %c0_i32 = arith.constant 0 : i32
    %c0_i32_0 = arith.constant 0 : i32
    %c0_i32_1 = arith.constant 0 : i32
    return %arg0, %c0_i32, %c0_i32_0 : i32, i32, i32
  }
  func.func @transform_10(%arg0: i32) -> (i32, i32) {
    %c0_i32 = arith.constant 0 : i32
    %c0_i32_0 = arith.constant 0 : i32
    %c0_i32_1 = arith.constant 0 : i32
    return %c0_i32, %c0_i32_0 : i32, i32
  }
}

</mosaic_0001>

<llo_original>
// kernel: faithful_bert_classifier_forward.1
$region0: #{faithful_bert_classifier_forward.1}
  #allocation0 [shape = 'u32[]', space=smem, size = 0x4, offset = 0x4, fixed_abs, tag = 'smem constant byte address 0x4 - core index']
  #allocation1 [shape = 'u32[144,128]{1,0:T(1,128)}', space=vmem, size = 0x12000, scoped, tag = 'internal scratch']
  #allocation2 [shape = 'f32[16,128]{1,0:T(8,128)}', space=vmem, size = 0x2000, scoped, tag = 'scratch operand']
  %s0 = inlined_call_operand.vmem [shape: f32[2,8,128], index: 0, kind: input, shape index: {}]
  %s1 = inlined_call_operand.vmem [shape: f32[2,1,8], index: 1, kind: input, shape index: {}]
  %s2 = inlined_call_operand.vmem [shape: f32[8,128], index: 2, kind: input, shape index: {}]
  %s3 = inlined_call_operand.vmem [shape: bf16[128,128], index: 3, kind: input, shape index: {}]
  %s4 = inlined_call_operand.vmem [shape: bf16[128,128], index: 4, kind: input, shape index: {}]
  %s5 = inlined_call_operand.hbm [shape: bf16[2,128,384], index: 5, kind: input, shape index: {}]
  %s6 = inlined_call_operand.vmem [shape: bf16[2,128,128], index: 6, kind: input, shape index: {}]
  %s7 = inlined_call_operand.hbm [shape: bf16[2,128,256], index: 7, kind: input, shape index: {}]
  %s8 = inlined_call_operand.hbm [shape: bf16[2,256,128], index: 8, kind: input, shape index: {}]
  %s9 = inlined_call_operand.vmem [shape: f32[2,16,256], index: 9, kind: input, shape index: {}]
  %s10 = inlined_call_operand.hbm [shape: f32[2,128], index: 10, kind: output, shape index: {}]
  %s11 = sld [smem:[#allocation0]]
  $region93: #{faithful_bert_classifier_forward.1} parent=0
    _
  %s13 = ssub.s32 1, %s11
  %s14 = scalar_select 0, %s13, %s11
  $region1: #{faithful_bert_classifier_forward.1} parent=0
    #allocation3 [shape = 'u8[196608]{0}', space=vmem, size = 0x30000, scoped, tag = 'input window, operand 5']
    #allocation4 [shape = 's32[2]{0}', space=sflag, size = 0x8, scoped, tag = 'scoped memory for faithful_bert_classifier_forward.1']
    #allocation5 [shape = 's32[2]{0}', space=sflag, size = 0x8, scoped, tag = 'scoped memory for faithful_bert_classifier_forward.1']
    #allocation6 [shape = 'u8[131072]{0}', space=vmem, size = 0x20000, scoped, tag = 'input window, operand 7']
    #allocation7 [shape = 's32[2]{0}', space=sflag, size = 0x8, scoped, tag = 'scoped memory for faithful_bert_classifier_forward.1']
    #allocation8 [shape = 'u8[131072]{0}', space=vmem, size = 0x20000, scoped, tag = 'input window, operand 8']
    #allocation9 [shape = 'u8[1024]{0}', space=vmem, size = 0x400, scoped, tag = 'output window, operand 0, single buffered']
    %15 = vsyncpa [#allocation4], 0
    %s16 = scalar_lea.sflag [#allocation4], 1
    %17 = vsyncpa %s16, 0
    %18 = vsyncpa [#allocation7], 0
    %s19 = scalar_lea.sflag [#allocation7], 1
    %20 = vsyncpa %s19, 0
    %21 = vsyncpa [#allocation5], 0
    loop: start=0, step=1, limit=4
    $region2: #{faithful_bert_classifier_forward.1} parent=1 // loop_pre_header
      _
    $region3: #{faithful_bert_classifier_forward.1} parent=1 // loop_header
      %s23 = sphi 0, %s27
      %p24 = scmp.ge.s32.totalorder %s23, 4
      %s31 = sphi 0, %s31
      %s33 = sphi 0, %s31
      %s34 = sphi 0, %s33
      %s48 = sphi 0, %s34
      %s52 = sphi 0, %s52
      %s54 = sphi 0, %s52
      %s55 = sphi 0, %s54
      %s69 = sphi 0, %s55
      %s73 = sphi 0, %s73
      %s75 = sphi 0, %s73
      %s76 = sphi 0, %s75
      %s90 = sphi 0, %s76
      %s94 = sphi 0, %s94
      %s96 = sphi 0, %s94
      %s97 = sphi 0, %s96
      %s111 = sphi 0, %s97
      %s115 = sphi 0, %s115
      %s117 = sphi 0, %s115
      %s118 = sphi 0, %s117
      %s132 = sphi 0, %s118
      %s138 = sphi 0, %s140
      %s141 = sphi 0, %s138
      %s142 = sphi 0, %s141
      %s158 = sphi 0, %s142
      %s164 = sphi 0, %s166
      %s167 = sphi 0, %s164
      %s168 = sphi 0, %s167
      %s184 = sphi 0, %s168
      %s190 = sphi 0, %s192
      %s193 = sphi 0, %s190
      %s194 = sphi 0, %s193
      %s210 = sphi 0, %s194
      %s216 = sphi 0, %s218
      %s219 = sphi 0, %s216
      %s220 = sphi 0, %s219
      %s236 = sphi 0, %s220
      %s242 = sphi 0, %s244
      %s245 = sphi 0, %s242
      %s246 = sphi 0, %s245
      %s262 = sphi 0, %s246
      %s266 = sphi 0, %s266
      %s268 = sphi 0, %s266
      %s269 = sphi 0, %s268
      %s283 = sphi 0, %s269
    $region4: #{faithful_bert_classifier_forward.1} parent=1 // loop_header_branch
      %26 = sbr.rel (%p24) target = $region8
    $region5: #{faithful_bert_classifier_forward.1} parent=1 // loop_body
      %s28 = ssub.s32 %s23, 1
      %s29 = ssub.s32 %s23, 2
      %s30 = sadd.s32 %s23, 1
      %s32 = sadd.s32 %s31, 1
      %p35 = scmp.eq.s32.totalorder %s23, 1
      %p36 = scmp.ne.s32.totalorder %s31, %s33
      %p37 = scmp.eq.s32.totalorder %s23, 0
      %p38 = por %p36, %p37
      %p39 = scmp.ne.s32.totalorder %s31, %s33
      %p40 = scmp.eq.s32.totalorder %s28, 1
      %p41 = por %p39, %p40
      %p42 = scmp.ne.s32.totalorder %s33, %s34
      %p43 = scmp.eq.s32.totalorder %s28, 0
      %p44 = por %p42, %p43
      %p45 = scmp.ne.s32.totalorder %s33, %s34
      %p46 = scmp.eq.s32.totalorder %s29, 1
      %p47 = por %p45, %p46
      %p49 = scmp.ne.s32.totalorder %s34, %s48
      %p50 = scmp.eq.s32.totalorder %s29, 0
      %p51 = por %p49, %p50
      %s53 = sadd.s32 %s52, 1
      %p56 = scmp.eq.s32.totalorder %s23, 1
      %p57 = scmp.ne.s32.totalorder %s52, %s54
      %p58 = scmp.eq.s32.totalorder %s23, 0
      %p59 = por %p57, %p58
      %p60 = scmp.ne.s32.totalorder %s52, %s54
      %p61 = scmp.eq.s32.totalorder %s28, 1
      %p62 = por %p60, %p61
      %p63 = scmp.ne.s32.totalorder %s54, %s55
      %p64 = scmp.eq.s32.totalorder %s28, 0
      %p65 = por %p63, %p64
      %p66 = scmp.ne.s32.totalorder %s54, %s55
      %p67 = scmp.eq.s32.totalorder %s29, 1
      %p68 = por %p66, %p67
      %p70 = scmp.ne.s32.totalorder %s55, %s69
      %p71 = scmp.eq.s32.totalorder %s29, 0
      %p72 = por %p70, %p71
      %s74 = sadd.s32 %s73, 1
      %p77 = scmp.eq.s32.totalorder %s23, 1
      %p78 = scmp.ne.s32.totalorder %s73, %s75
      %p79 = scmp.eq.s32.totalorder %s23, 0
      %p80 = por %p78, %p79
      %p81 = scmp.ne.s32.totalorder %s73, %s75
      %p82 = scmp.eq.s32.totalorder %s28, 1
      %p83 = por %p81, %p82
      %p84 = scmp.ne.s32.totalorder %s75, %s76
      %p85 = scmp.eq.s32.totalorder %s28, 0
      %p86 = por %p84, %p85
      %p87 = scmp.ne.s32.totalorder %s75, %s76
      %p88 = scmp.eq.s32.totalorder %s29, 1
      %p89 = por %p87, %p88
      %p91 = scmp.ne.s32.totalorder %s76, %s90
      %p92 = scmp.eq.s32.totalorder %s29, 0
      %p93 = por %p91, %p92
      %s95 = sadd.s32 %s94, 1
      %p98 = scmp.eq.s32.totalorder %s23, 1
      %p99 = scmp.ne.s32.totalorder %s94, %s96
      %p100 = scmp.eq.s32.totalorder %s23, 0
      %p101 = por %p99, %p100
      %p102 = scmp.ne.s32.totalorder %s94, %s96
      %p103 = scmp.eq.s32.totalorder %s28, 1
      %p104 = por %p102, %p103
      %p105 = scmp.ne.s32.totalorder %s96, %s97
      %p106 = scmp.eq.s32.totalorder %s28, 0
      %p107 = por %p105, %p106
      %p108 = scmp.ne.s32.totalorder %s96, %s97
      %p109 = scmp.eq.s32.totalorder %s29, 1
      %p110 = por %p108, %p109
      %p112 = scmp.ne.s32.totalorder %s97, %s111
      %p113 = scmp.eq.s32.totalorder %s29, 0
      %p114 = por %p112, %p113
      %s116 = sadd.s32 %s115, 1
      %p119 = scmp.eq.s32.totalorder %s23, 1
      %p120 = scmp.ne.s32.totalorder %s115, %s117
      %p121 = scmp.eq.s32.totalorder %s23, 0
      %p122 = por %p120, %p121
      %p123 = scmp.ne.s32.totalorder %s115, %s117
      %p124 = scmp.eq.s32.totalorder %s28, 1
      %p125 = por %p123, %p124
      %p126 = scmp.ne.s32.totalorder %s117, %s118
      %p127 = scmp.eq.s32.totalorder %s28, 0
      %p128 = por %p126, %p127
      %p129 = scmp.ne.s32.totalorder %s117, %s118
      %p130 = scmp.eq.s32.totalorder %s29, 1
      %p131 = por %p129, %p130
      %p133 = scmp.ne.s32.totalorder %s118, %s132
      %p134 = scmp.eq.s32.totalorder %s29, 0
      %p135 = por %p133, %p134
      %s136 = ssub.s32 %s23, %s30
      %p137 = scmp.eq.s32.totalorder %s136, 0
      %s139 = sadd.s32 %s138, 1
      %s140 = scalar_select %p137, %s138, %s139
      %p143 = pneg %p137
      %p144 = scmp.eq.s32.totalorder %s23, 1
      %p145 = por %p143, %p144
      %p146 = scmp.ne.s32.totalorder %s138, %s141
      %p147 = scmp.eq.s32.totalorder %s23, 0
      %p148 = por %p146, %p147
      %p149 = scmp.ne.s32.totalorder %s138, %s141
      %p150 = scmp.eq.s32.totalorder %s28, 1
      %p151 = por %p149, %p150
      %p152 = scmp.ne.s32.totalorder %s141, %s142
      %p153 = scmp.eq.s32.totalorder %s28, 0
      %p154 = por %p152, %p153
      %p155 = scmp.ne.s32.totalorder %s141, %s142
      %p156 = scmp.eq.s32.totalorder %s29, 1
      %p157 = por %p155, %p156
      %p159 = scmp.ne.s32.totalorder %s142, %s158
      %p160 = scmp.eq.s32.totalorder %s29, 0
      %p161 = por %p159, %p160
      %s162 = ssub.s32 %s23, %s30
      %p163 = scmp.eq.s32.totalorder %s162, 0
      %s165 = sadd.s32 %s164, 1
      %s166 = scalar_select %p163, %s164, %s165
      %p169 = pneg %p163
      %p170 = scmp.eq.s32.totalorder %s23, 1
      %p171 = por %p169, %p170
      %p172 = scmp.ne.s32.totalorder %s164, %s167
      %p173 = scmp.eq.s32.totalorder %s23, 0
      %p174 = por %p172, %p173
      %p175 = scmp.ne.s32.totalorder %s164, %s167
      %p176 = scmp.eq.s32.totalorder %s28, 1
      %p177 = por %p175, %p176
      %p178 = scmp.ne.s32.totalorder %s167, %s168
      %p179 = scmp.eq.s32.totalorder %s28, 0
      %p180 = por %p178, %p179
      %p181 = scmp.ne.s32.totalorder %s167, %s168
      %p182 = scmp.eq.s32.totalorder %s29, 1
      %p183 = por %p181, %p182
      %p185 = scmp.ne.s32.totalorder %s168, %s184
      %p186 = scmp.eq.s32.totalorder %s29, 0
      %p187 = por %p185, %p186
      %s188 = ssub.s32 %s23, %s30
      %p189 = scmp.eq.s32.totalorder %s188, 0
      %s191 = sadd.s32 %s190, 1
      %s192 = scalar_select %p189, %s190, %s191
      %p195 = pneg %p189
      %p196 = scmp.eq.s32.totalorder %s23, 1
      %p197 = por %p195, %p196
      %p198 = scmp.ne.s32.totalorder %s190, %s193
      %p199 = scmp.eq.s32.totalorder %s23, 0
      %p200 = por %p198, %p199
      %p201 = scmp.ne.s32.totalorder %s190, %s193
      %p202 = scmp.eq.s32.totalorder %s28, 1
      %p203 = por %p201, %p202
      %p204 = scmp.ne.s32.totalorder %s193, %s194
      %p205 = scmp.eq.s32.totalorder %s28, 0
      %p206 = por %p204, %p205
      %p207 = scmp.ne.s32.totalorder %s193, %s194
      %p208 = scmp.eq.s32.totalorder %s29, 1
      %p209 = por %p207, %p208
      %p211 = scmp.ne.s32.totalorder %s194, %s210
      %p212 = scmp.eq.s32.totalorder %s29, 0
      %p213 = por %p211, %p212
      %s214 = ssub.s32 %s23, %s30
      %p215 = scmp.eq.s32.totalorder %s214, 0
      %s217 = sadd.s32 %s216, 1
      %s218 = scalar_select %p215, %s216, %s217
      %p221 = pneg %p215
      %p222 = scmp.eq.s32.totalorder %s23, 1
      %p223 = por %p221, %p222
      %p224 = scmp.ne.s32.totalorder %s216, %s219
      %p225 = scmp.eq.s32.totalorder %s23, 0
      %p226 = por %p224, %p225
      %p227 = scmp.ne.s32.totalorder %s216, %s219
      %p228 = scmp.eq.s32.totalorder %s28, 1
      %p229 = por %p227, %p228
      %p230 = scmp.ne.s32.totalorder %s219, %s220
      %p231 = scmp.eq.s32.totalorder %s28, 0
      %p232 = por %p230, %p231
      %p233 = scmp.ne.s32.totalorder %s219, %s220
      %p234 = scmp.eq.s32.totalorder %s29, 1
      %p235 = por %p233, %p234
      %p237 = scmp.ne.s32.totalorder %s220, %s236
      %p238 = scmp.eq.s32.totalorder %s29, 0
      %p239 = por %p237, %p238
      %s240 = ssub.s32 %s23, %s30
      %p241 = scmp.eq.s32.totalorder %s240, 0
      %s243 = sadd.s32 %s242, 1
      %s244 = scalar_select %p241, %s242, %s243
      %p247 = pneg %p241
      %p248 = scmp.eq.s32.totalorder %s23, 1
      %p249 = por %p247, %p248
      %p250 = scmp.ne.s32.totalorder %s242, %s245
      %p251 = scmp.eq.s32.totalorder %s23, 0
      %p252 = por %p250, %p251
      %p253 = scmp.ne.s32.totalorder %s242, %s245
      %p254 = scmp.eq.s32.totalorder %s28, 1
      %p255 = por %p253, %p254
      %p256 = scmp.ne.s32.totalorder %s245, %s246
      %p257 = scmp.eq.s32.totalorder %s28, 0
      %p258 = por %p256, %p257
      %p259 = scmp.ne.s32.totalorder %s245, %s246
      %p260 = scmp.eq.s32.totalorder %s29, 1
      %p261 = por %p259, %p260
      %p263 = scmp.ne.s32.totalorder %s246, %s262
      %p264 = scmp.eq.s32.totalorder %s29, 0
      %p265 = por %p263, %p264
      %s267 = sadd.s32 %s266, 1
      %p270 = scmp.eq.s32.totalorder %s23, 1
      %p271 = scmp.ne.s32.totalorder %s266, %s268
      %p272 = scmp.eq.s32.totalorder %s23, 0
      %p273 = por %p271, %p272
      %p274 = scmp.ne.s32.totalorder %s266, %s268
      %p275 = scmp.eq.s32.totalorder %s28, 1
      %p276 = por %p274, %p275
      %p277 = scmp.ne.s32.totalorder %s268, %s269
      %p278 = scmp.eq.s32.totalorder %s28, 0
      %p279 = por %p277, %p278
      %p280 = scmp.ne.s32.totalorder %s268, %s269
      %p281 = scmp.eq.s32.totalorder %s29, 1
      %p282 = por %p280, %p281
      %p284 = scmp.ne.s32.totalorder %s269, %s283
      %p285 = scmp.eq.s32.totalorder %s29, 0
      %p286 = por %p284, %p285
      %p287 = scmp.le.s32.totalorder 1, %s23
      %p288 = scmp.lt.s32.totalorder %s23, 3
      %p289 = pnand %p287, %p288
      %p290 = pneg %p289
      // Predicated region
      $region9: #{faithful_bert_classifier_forward.1} parent=5 // pred_check
        _
      $region10: #{faithful_bert_classifier_forward.1} parent=5 // pred_check_branch
        %292 = sbr.rel (%p289) target = $region12
      $region11: #{faithful_bert_classifier_forward.1} parent=5 // pred_region
        %s293 = ssub.s32 %s23, 1
        // Predicated region
        $region13: #{faithful_bert_classifier_forward.1} parent=11 // pred_check
          %p294 = pneg %p44
        $region14: #{faithful_bert_classifier_forward.1} parent=11 // pred_check_branch
          %296 = sbr.rel (%p294) target = $region16
        $region15: #{faithful_bert_classifier_forward.1} parent=11 // pred_region
          _
        $region16: #{faithful_bert_classifier_forward.1} parent=11 // pred_fallthru
          _
        // Predicated region
        $region17: #{faithful_bert_classifier_forward.1} parent=11 // pred_check
          %p297 = pneg %p65
        $region18: #{faithful_bert_classifier_forward.1} parent=11 // pred_check_branch
          %299 = sbr.rel (%p297) target = $region20
        $region19: #{faithful_bert_classifier_forward.1} parent=11 // pred_region
          _
        $region20: #{faithful_bert_classifier_forward.1} parent=11 // pred_fallthru
          _
        // Predicated region
        $region21: #{faithful_bert_classifier_forward.1} parent=11 // pred_check
          %p300 = pneg %p86
        $region22: #{faithful_bert_classifier_forward.1} parent=11 // pred_check_branch
          %302 = sbr.rel (%p300) target = $region24
        $region23: #{faithful_bert_classifier_forward.1} parent=11 // pred_region
          _
        $region24: #{faithful_bert_classifier_forward.1} parent=11 // pred_fallthru
          _
        // Predicated region
        $region25: #{faithful_bert_classifier_forward.1} parent=11 // pred_check
          %p303 = pneg %p107
        $region26: #{faithful_bert_classifier_forward.1} parent=11 // pred_check_branch
          %305 = sbr.rel (%p303) target = $region28
        $region27: #{faithful_bert_classifier_forward.1} parent=11 // pred_region
          _
        $region28: #{faithful_bert_classifier_forward.1} parent=11 // pred_fallthru
          _
        // Predicated region
        $region29: #{faithful_bert_classifier_forward.1} parent=11 // pred_check
          %p306 = pneg %p128
        $region30: #{faithful_bert_classifier_forward.1} parent=11 // pred_check_branch
          %308 = sbr.rel (%p306) target = $region32
        $region31: #{faithful_bert_classifier_forward.1} parent=11 // pred_region
          _
        $region32: #{faithful_bert_classifier_forward.1} parent=11 // pred_fallthru
          _
      $region12: #{faithful_bert_classifier_forward.1} parent=5 // pred_fallthru
        _
      %p309 = scmp.lt.s32.totalorder %s23, 2
      // Predicated region
      $region33: #{faithful_bert_classifier_forward.1} parent=5 // pred_check
        %p310 = pneg %p309
      $region34: #{faithful_bert_classifier_forward.1} parent=5 // pred_check_branch
        %312 = sbr.rel (%p310) target = $region36
      $region35: #{faithful_bert_classifier_forward.1} parent=5 // pred_region
        // Predicated region
        $region37: #{faithful_bert_classifier_forward.1} parent=35 // pred_check
          %p313 = pneg %p148
        $region38: #{faithful_bert_classifier_forward.1} parent=35 // pred_check_branch
          %315 = sbr.rel (%p313) target = $region40
        $region39: #{faithful_bert_classifier_forward.1} parent=35 // pred_region
          %s316 = sand.u32 %s138, 1
          %s317 = scalar_lea.sflag [#allocation4], %s316
          %s318 = sand.u32 %s138, 1
          %s319 = smul.addr %s318, 192
          %s320 = scalar_lea.vmem [#allocation3], %s319
          %s322 = ssub.s32 3072, 3072
          %323 = vsyncadd %s317, %s322
          %s324 = smul.addr %s23, 48
          %s325 = smul.addr %s324, 64
          %s326 = scalar_lea.hbm %s5, %s325
          %s327 = sshll.u32 %s320, 4
          %s328 = int_to_ptr.vmem [resolvable:$true] %s327
          %333 = dma.hbm_to_vmem [thread:$0]  %s326, 3072, %s328, %s317, 192, 192, 12
        $region40: #{faithful_bert_classifier_forward.1} parent=35 // pred_fallthru
          _
        // Predicated region
        $region41: #{faithful_bert_classifier_forward.1} parent=35 // pred_check
          %p334 = pneg %p174
        $region42: #{faithful_bert_classifier_forward.1} parent=35 // pred_check_branch
          %336 = sbr.rel (%p334) target = $region44
        $region43: #{faithful_bert_classifier_forward.1} parent=35 // pred_region
          %p337 = scmp.lt.s32.totalorder %s23, 1
          %s338 = scalar_select %p337, %s23, 1
          %s339 = smul.addr %s338, 16
          %s340 = smul.addr %s339, 4
          %s341 = scalar_lea.vmem %s6, %s340
        $region44: #{faithful_bert_classifier_forward.1} parent=35 // pred_fallthru
          _
        // Predicated region
        $region45: #{faithful_bert_classifier_forward.1} parent=35 // pred_check
          %p342 = pneg %p200
        $region46: #{faithful_bert_classifier_forward.1} parent=35 // pred_check_branch
          %344 = sbr.rel (%p342) target = $region48
        $region47: #{faithful_bert_classifier_forward.1} parent=35 // pred_region
          %s345 = sand.u32 %s23, 1
          %s346 = scalar_lea.sflag [#allocation7], %s345
          %s347 = sand.u32 %s190, 1
          %s348 = smul.addr %s347, 128
          %s349 = scalar_lea.vmem [#allocation6], %s348
          %s351 = ssub.s32 2048, 2048
          %352 = vsyncadd %s346, %s351
          %s353 = smul.addr %s23, 32
          %s354 = smul.addr %s353, 64
          %s355 = scalar_lea.hbm %s7, %s354
          %s356 = sshll.u32 %s349, 4
          %s357 = int_to_ptr.vmem [resolvable:$true] %s356
          %362 = dma.hbm_to_vmem [thread:$0]  %s355, 2048, %s357, %s346, 128, 128, 8
        $region48: #{faithful_bert_classifier_forward.1} parent=35 // pred_fallthru
          _
        // Predicated region
        $region49: #{faithful_bert_classifier_forward.1} parent=35 // pred_check
          %p363 = pneg %p226
        $region50: #{faithful_bert_classifier_forward.1} parent=35 // pred_check_branch
          %365 = sbr.rel (%p363) target = $region52
        $region51: #{faithful_bert_classifier_forward.1} parent=35 // pred_region
          %s366 = sand.u32 %s23, 1
          %s367 = scalar_lea.sflag [#allocation7], %s366
          %s368 = sand.u32 %s216, 1
          %s369 = smul.addr %s368, 128
          %s370 = scalar_lea.vmem [#allocation8], %s369
          %s372 = ssub.s32 2048, 2048
          %373 = vsyncadd %s367, %s372
          %s374 = smul.addr %s23, 32
          %s375 = smul.addr %s374, 64
          %s376 = scalar_lea.hbm %s8, %s375
          %s377 = sshll.u32 %s370, 4
          %s378 = int_to_ptr.vmem [resolvable:$true] %s377
          %383 = dma.hbm_to_vmem [thread:$0]  %s376, 2048, %s378, %s367, 64, 64, 4
        $region52: #{faithful_bert_classifier_forward.1} parent=35 // pred_fallthru
          _
        // Predicated region
        $region53: #{faithful_bert_classifier_forward.1} parent=35 // pred_check
          %p384 = pneg %p252
        $region54: #{faithful_bert_classifier_forward.1} parent=35 // pred_check_branch
          %386 = sbr.rel (%p384) target = $region56
        $region55: #{faithful_bert_classifier_forward.1} parent=35 // pred_region
          %p387 = scmp.lt.s32.totalorder %s23, 1
          %s388 = scalar_select %p387, %s23, 1
          %s389 = smul.addr %s388, 4
          %s390 = smul.addr %s389, 8
          %s391 = scalar_lea.vmem %s9, %s390
        $region56: #{faithful_bert_classifier_forward.1} parent=35 // pred_fallthru
          _
      $region36: #{faithful_bert_classifier_forward.1} parent=5 // pred_fallthru
        _
      %p392 = scmp.le.s32.totalorder 1, %s23
      %p393 = scmp.lt.s32.totalorder %s23, 3
      %p394 = pnand %p392, %p393
      %p395 = pneg %p394
      // Predicated region
      $region57: #{faithful_bert_classifier_forward.1} parent=5 // pred_check
        _
      $region58: #{faithful_bert_classifier_forward.1} parent=5 // pred_check_branch
        %397 = sbr.rel (%p394) target = $region60
      $region59: #{faithful_bert_classifier_forward.1} parent=5 // pred_region
        %s398 = ssub.s32 %s23, 1
        %s399 = sand.u32 %s141, 1
        %s400 = scalar_lea.sflag [#allocation4], %s399
        %s401 = sand.u32 %s141, 1
        %s402 = smul.addr %s401, 192
        %s403 = scalar_lea.vmem [#allocation3], %s402
        // Predicated region
        $region61: #{faithful_bert_classifier_forward.1} parent=59 // pred_check
          %p404 = pneg %p154
        $region62: #{faithful_bert_classifier_forward.1} parent=59 // pred_check_branch
          %406 = sbr.rel (%p404) target = $region64
        $region63: #{faithful_bert_classifier_forward.1} parent=59 // pred_region
          %407 = dma.done %s400, 3072
        $region64: #{faithful_bert_classifier_forward.1} parent=59 // pred_fallthru
          _
        %s408 = sand.u32 %s28, 1
        %s409 = scalar_lea.sflag [#allocation7], %s408
        %s410 = sand.u32 %s193, 1
        %s411 = smul.addr %s410, 128
        %s412 = scalar_lea.vmem [#allocation6], %s411
        // Predicated region
        $region65: #{faithful_bert_classifier_forward.1} parent=59 // pred_check
          %p413 = pneg %p206
        $region66: #{faithful_bert_classifier_forward.1} parent=59 // pred_check_branch
          %415 = sbr.rel (%p413) target = $region68
        $region67: #{faithful_bert_classifier_forward.1} parent=59 // pred_region
          %416 = dma.done %s409, 2048
        $region68: #{faithful_bert_classifier_forward.1} parent=59 // pred_fallthru
          _
        %s417 = sand.u32 %s28, 1
        %s418 = scalar_lea.sflag [#allocation7], %s417
        %s419 = sand.u32 %s219, 1
        %s420 = smul.addr %s419, 128
        %s421 = scalar_lea.vmem [#allocation8], %s420
        // Predicated region
        $region69: #{faithful_bert_classifier_forward.1} parent=59 // pred_check
          %p422 = pneg %p232
        $region70: #{faithful_bert_classifier_forward.1} parent=59 // pred_check_branch
          %424 = sbr.rel (%p422) target = $region72
        $region71: #{faithful_bert_classifier_forward.1} parent=59 // pred_region
          %425 = dma.done %s418, 2048
        $region72: #{faithful_bert_classifier_forward.1} parent=59 // pred_fallthru
          _
        %p426 = pneg %p44
        %p427 = pneg %p41
        %p428 = pneg %p65
        %p429 = pneg %p62
        %p430 = pneg %p86
        %p431 = pneg %p83
        %p432 = pneg %p107
        %p433 = pneg %p104
        %p434 = pneg %p128
        %p435 = pneg %p125
        %s436 = sand.u32 %s141, 1
        %s437 = scalar_lea.sflag [#allocation4], %s436
        %s438 = sand.u32 %s141, 1
        %s439 = smul.addr %s438, 192
        %s440 = scalar_lea.vmem [#allocation3], %s439
        %p441 = pneg %p154
        %p442 = pneg %p151
        %p443 = scmp.lt.s32.totalorder %s28, 1
        %s444 = scalar_select %p443, %s28, 1
        %s445 = smul.addr %s444, 16
        %s446 = smul.addr %s445, 4
        %s447 = scalar_lea.vmem %s6, %s446
        %p448 = pneg %p180
        %p449 = pneg %p177
        %s450 = sand.u32 %s28, 1
        %s451 = scalar_lea.sflag [#allocation7], %s450
        %s452 = sand.u32 %s193, 1
        %s453 = smul.addr %s452, 128
        %s454 = scalar_lea.vmem [#allocation6], %s453
        %p455 = pneg %p206
        %p456 = pneg %p203
        %s457 = sand.u32 %s28, 1
        %s458 = scalar_lea.sflag [#allocation7], %s457
        %s459 = sand.u32 %s219, 1
        %s460 = smul.addr %s459, 128
        %s461 = scalar_lea.vmem [#allocation8], %s460
        %p462 = pneg %p232
        %p463 = pneg %p229
        %p464 = scmp.lt.s32.totalorder %s28, 1
        %s465 = scalar_select %p464, %s28, 1
        %s466 = smul.addr %s465, 4
        %s467 = smul.addr %s466, 8
        %s468 = scalar_lea.vmem %s9, %s467
        %p469 = pneg %p258
        %p470 = pneg %p255
        %p471 = pneg %p279
        %p472 = pneg %p276
        %p473 = scmp.lt.s32.totalorder %s28, 1
        %s474 = scalar_select %p473, %s28, 1
        %s475 = smul.addr %s474, 16
        %s476 = smul.addr %s475, 4
        %s477 = scalar_lea.vmem %s6, %s476
        %p478 = scmp.lt.s32.totalorder %s28, 1
        %s479 = scalar_select %p478, %s28, 1
        %s480 = smul.addr %s479, 4
        %s481 = smul.addr %s480, 8
        %s482 = scalar_lea.vmem %s9, %s481
        %p484 = scmp.eq.s32.totalorder %s28, 0
        // Predicated region
        $region73: #{faithful_bert_classifier_forward.1} parent=59 // pred_check
          %p485 = pneg %p484
        $region74: #{faithful_bert_classifier_forward.1} parent=59 // pred_check_branch
          %487 = sbr.rel (%p485) target = $region76
        $region75: #{faithful_bert_classifier_forward.1} parent=59 // pred_region
          %v488 = vld [vmem:[%s2] sm:$0x1]
          %v489 = vld [vmem:[%s2 + $0x1] sm:$0x1]
          %v490 = vld [vmem:[%s0] sm:$0xff]
          %v491 = vld [vmem:[%s0 + $0x8] sm:$0xff]
          %492 = vadd.xlane.f32.xlu0 %v490
          %v493 = vpop.xlane.xlu0 %492
          %494 = vadd.xlane.f32.xlu0 %v491
          %v495 = vpop.xlane.xlu0 %494
          %v496 = vrcp.pop 128.0
          %v497 = vmul.f32 %v493, %v496
          %v498 = vmul.f32 %v495, %v496
          %v499 = vsub.f32 %v490, %v497
          %v500 = vsub.f32 %v491, %v498
          %v501 = vmul.f32 %v499, %v499
          %v502 = vmul.f32 %v500, %v500
          %503 = vadd.xlane.f32.xlu0 %v501
          %v504 = vpop.xlane.xlu0 %503
          %505 = vadd.xlane.f32.xlu0 %v502
          %v506 = vpop.xlane.xlu0 %505
          %v507 = vmul.f32 %v504, %v496
          %v508 = vmul.f32 %v506, %v496
          %v509 = vadd.f32 %v507, 1e-12
          %v510 = vadd.f32 %v508, 1e-12
          %v511 = vrsqrt.pop %v509
          %v512 = vrsqrt.pop %v510
          %v513 = vmul.f32 %v499, %v511
          %v514 = vmul.f32 %v500, %v512
          %v515 = vlaneseq
          %v516 = vshrl.u32 %v515, 7
          %v517 = vsub.s32 0, %v516
          %v518 = vrot.slane %v488, %v517
          %v519 = vmul.f32 %v513, %v518
          %v520 = vmul.f32 %v514, %v518
          %v521 = vlaneseq
          %v522 = vshrl.u32 %v521, 7
          %v523 = vsub.s32 0, %v522
          %v524 = vrot.slane %v489, %v523
          %v525 = vadd.f32 %v519, %v524
          %v526 = vadd.f32 %v520, %v524
          %527 = vst [vmem:[#allocation2] sm:$0xff] %v525
          %528 = vst [vmem:[#allocation2 + $0x8] sm:$0xff] %v526
        $region76: #{faithful_bert_classifier_forward.1} parent=59 // pred_fallthru
          _
        %v529 = vld [vmem:[#allocation2] sm:$0xff]
        %v530 = vld [vmem:[#allocation2 + $0x8] sm:$0xff]
        %v531 = vpack.c.bf16 %v530, %v529
        %v532 = vld [vmem:[%s482] ss:$0 sm:$0xff]
        %v533 = vld [vmem:[%s482 + $0x1] ss:$0 sm:$0xff]
        %v534 = vld [vmem:[%s482 + $0x2] ss:$0 sm:$0xff]
        %v535 = vld [vmem:[%s482 + $0x3] ss:$0 sm:$0xff]
        %s536 = scalar_lea.vmem %s482, 4
        %v537 = vld [vmem:[%s536] ss:$8 sm:$0x3]
        %v538 = vld [vmem:[%s482 + $0x5] ss:$0 sm:$0xff]
        %v539 = vld [vmem:[%s482 + $0x6] ss:$0 sm:$0xff]
        %v540 = vld [vmem:[%s482 + $0x7] ss:$0 sm:$0xff]
        %v541 = vld [vmem:[%s482 + $0x10] ss:$0 sm:$0xff]
        %v542 = vld [vmem:[%s482 + $0x11] ss:$0 sm:$0xff]
        %v543 = vld [vmem:[%s403] sm:$0xff]
        %v544 = vld [vmem:[%s403 + $0x8] sm:$0xf]
        %v545 = vld [vmem:[%s403 + $0xc] sm:$0xff]
        %v546 = vld [vmem:[%s403 + $0x14] sm:$0xf]
        %v547 = vld [vmem:[%s403 + $0x18] sm:$0xff]
        %v548 = vld [vmem:[%s403 + $0x20] sm:$0xf]
        %v549 = vld [vmem:[%s403 + $0x24] sm:$0xff]
        %v550 = vld [vmem:[%s403 + $0x2c] sm:$0xf]
        %v551 = vld [vmem:[%s403 + $0x30] sm:$0xff]
        %v552 = vld [vmem:[%s403 + $0x38] sm:$0xf]
        %v553 = vld [vmem:[%s403 + $0x3c] sm:$0xff]
        %v554 = vld [vmem:[%s403 + $0x44] sm:$0xf]
        %v555 = vld [vmem:[%s403 + $0x48] sm:$0xff]
        %v556 = vld [vmem:[%s403 + $0x50] sm:$0xf]
        %v557 = vld [vmem:[%s403 + $0x54] sm:$0xff]
        %v558 = vld [vmem:[%s403 + $0x5c] sm:$0xf]
        %v559 = vld [vmem:[%s403 + $0x60] sm:$0xff]
        %v560 = vld [vmem:[%s403 + $0x68] sm:$0xf]
        %v561 = vld [vmem:[%s403 + $0x6c] sm:$0xff]
        %v562 = vld [vmem:[%s403 + $0x74] sm:$0xf]
        %v563 = vld [vmem:[%s403 + $0x78] sm:$0xff]
        %v564 = vld [vmem:[%s403 + $0x80] sm:$0xf]
        %v565 = vld [vmem:[%s403 + $0x84] sm:$0xff]
        %v566 = vld [vmem:[%s403 + $0x8c] sm:$0xf]
        %v567 = vld [vmem:[%s403 + $0x90] sm:$0xff]
        %v568 = vld [vmem:[%s403 + $0x98] sm:$0xf]
        %v569 = vld [vmem:[%s403 + $0x9c] sm:$0xff]
        %v570 = vld [vmem:[%s403 + $0xa4] sm:$0xf]
        %v571 = vld [vmem:[%s403 + $0xa8] sm:$0xff]
        %v572 = vld [vmem:[%s403 + $0xb0] sm:$0xf]
        %v573 = vld [vmem:[%s403 + $0xb4] sm:$0xff]
        %v574 = vld [vmem:[%s403 + $0xbc] sm:$0xf]
        %v607 = vunpack.c.l.b16 %v543
        %v608 = vunpack.c.h.b16 %v543
        %v609 = vunpack.c.l.b16 %v544
        %v610 = vunpack.c.l.b16 %v545
        %v611 = vunpack.c.h.b16 %v545
        %v612 = vunpack.c.l.b16 %v546
        %v613 = vunpack.c.l.b16 %v547
        %v614 = vunpack.c.h.b16 %v547
        %v615 = vunpack.c.l.b16 %v548
        %v616 = vunpack.c.l.b16 %v549
        %v617 = vunpack.c.h.b16 %v549
        %v618 = vunpack.c.l.b16 %v550
        %v619 = vunpack.c.l.b16 %v551
        %v620 = vunpack.c.h.b16 %v551
        %v621 = vunpack.c.l.b16 %v552
        %v622 = vunpack.c.l.b16 %v553
        %v623 = vunpack.c.h.b16 %v553
        %v624 = vunpack.c.l.b16 %v554
        %v625 = vunpack.c.l.b16 %v555
        %v626 = vunpack.c.h.b16 %v555
        %v627 = vunpack.c.l.b16 %v556
        %v628 = vunpack.c.l.b16 %v557
        %v629 = vunpack.c.h.b16 %v557
        %v630 = vunpack.c.l.b16 %v558
        %v631 = vunpack.c.l.b16 %v559
        %v632 = vunpack.c.h.b16 %v559
        %v633 = vunpack.c.l.b16 %v560
        %v634 = vunpack.c.l.b16 %v561
        %v635 = vunpack.c.h.b16 %v561
        %v636 = vunpack.c.l.b16 %v562
        %v637 = vunpack.c.l.b16 %v563
        %v638 = vunpack.c.h.b16 %v563
        %v639 = vunpack.c.l.b16 %v564
        %v640 = vunpack.c.l.b16 %v565
        %v641 = vunpack.c.h.b16 %v565
        %v642 = vunpack.c.l.b16 %v566
        %v643 = vunpack.c.l.b16 %v567
        %v644 = vunpack.c.h.b16 %v567
        %v645 = vunpack.c.l.b16 %v568
        %v646 = vunpack.c.l.b16 %v569
        %v647 = vunpack.c.h.b16 %v569
        %v648 = vunpack.c.l.b16 %v570
        %v649 = vunpack.c.l.b16 %v571
        %v650 = vunpack.c.h.b16 %v571
        %v651 = vunpack.c.l.b16 %v572
        %v652 = vunpack.c.l.b16 %v573
        %v653 = vunpack.c.h.b16 %v573
        %v654 = vunpack.c.l.b16 %v574
        %v655 = vpack.c.b16 %v610, %v607
        %v656 = vpack.c.b16 %v611, %v608
        %v657 = vpack.c.b16 %v612, %v609
        %v658 = vpack.c.b16 %v616, %v613
        %v659 = vpack.c.b16 %v617, %v614
        %v660 = vpack.c.b16 %v618, %v615
        %v661 = vpack.c.b16 %v622, %v619
        %v662 = vpack.c.b16 %v623, %v620
        %v663 = vpack.c.b16 %v624, %v621
        %v664 = vpack.c.b16 %v628, %v625
        %v665 = vpack.c.b16 %v629, %v626
        %v666 = vpack.c.b16 %v630, %v627
        %v667 = vpack.c.b16 %v634, %v631
        %v668 = vpack.c.b16 %v635, %v632
        %v669 = vpack.c.b16 %v636, %v633
        %v670 = vpack.c.b16 %v640, %v637
        %v671 = vpack.c.b16 %v641, %v638
        %v672 = vpack.c.b16 %v642, %v639
        %v673 = vpack.c.b16 %v646, %v643
        %v674 = vpack.c.b16 %v647, %v644
        %v675 = vpack.c.b16 %v648, %v645
        %v676 = vpack.c.b16 %v652, %v649
        %v677 = vpack.c.b16 %v653, %v650
        %v678 = vpack.c.b16 %v654, %v651
        %703 = vmatprep.subr.bf16.mxu0 %v656
        %704 = vmatpush1.bf16.msra.mxu0 %v655
        %705 = vmatprep.subr.bf16.mxu0 %v659
        %706 = vmatpush1.bf16.msra.mxu0 %v658
        %707 = vmatprep.subr.bf16.mxu0 %v662
        %708 = vmatpush1.bf16.msra.mxu0 %v661
        %709 = vmatprep.subr.bf16.mxu0 %v665
        %710 = vmatpush1.bf16.msra.mxu0 %v664
        %711 = vmatprep.subr.bf16.mxu0 %v668
        %712 = vmatpush1.bf16.msra.mxu0 %v667
        %713 = vmatprep.subr.bf16.mxu0 %v671
        %714 = vmatpush1.bf16.msra.mxu0 %v670
        %715 = vmatprep.subr.bf16.mxu0 %v674
        %716 = vmatpush1.bf16.msra.mxu0 %v673
        %717 = vmatprep.subr.bf16.mxu0 %v677
        %718 = vmatpush1.bf16.msra.mxu0 %v676
        %719 = vmatprep.subr.bf16.mxu0 0
        %720 = vmatpush1.bf16.msra.mxu0 0
        %721 = vmatprep.subr.bf16.mxu0 0
        %722 = vmatpush1.bf16.msra.mxu0 0
        %723 = vmatprep.subr.bf16.mxu0 0
        %724 = vmatpush1.bf16.msra.mxu0 0
        %725 = vmatprep.subr.bf16.mxu0 0
        %726 = vmatpush1.bf16.msra.mxu0 0
        %727 = vmatprep.subr.bf16.mxu0 0
        %728 = vmatpush1.bf16.msra.mxu0 0
        %729 = vmatprep.subr.bf16.mxu0 0
        %730 = vmatpush1.bf16.msra.mxu0 0
        %731 = vmatprep.subr.bf16.mxu0 0
        %732 = vmatpush1.bf16.msra.mxu0 0
        %733 = vmatprep.subr.bf16.mxu0 0
        %734 = vmatpush1.bf16.msra.mxu0 0
        %735 = vmatprep.mubr.bf16.mxu0 0
        %736 = vmatmul.mubr.bf16.gmra.mrb[0].mxu0 %v531
        %v737 = vpop.f32.mrb[0].mxu0
        %v738 = vadd.f32 0.0, %v737
        %v739 = vpop.f32.mrb[0].mxu0
        %v740 = vadd.f32 0.0, %v739
        %v741 = vpop.f32.mrb[0].mxu0
        %v742 = vadd.f32 0.0, %v741
        %v743 = vpop.f32.mrb[0].mxu0
        %v744 = vadd.f32 0.0, %v743
        %745 = vdwg.mxu0
        %746 = vmatprep.subr.bf16.mxu0 0
        %747 = vmatpush1.bf16.msra.mxu0 %v657
        %748 = vmatprep.subr.bf16.mxu0 0
        %749 = vmatpush1.bf16.msra.mxu0 %v660
        %750 = vmatprep.subr.bf16.mxu0 0
        %751 = vmatpush1.bf16.msra.mxu0 %v663
        %752 = vmatprep.subr.bf16.mxu0 0
        %753 = vmatpush1.bf16.msra.mxu0 %v666
        %754 = vmatprep.subr.bf16.mxu0 0
        %755 = vmatpush1.bf16.msra.mxu0 %v669
        %756 = vmatprep.subr.bf16.mxu0 0
        %757 = vmatpush1.bf16.msra.mxu0 %v672
        %758 = vmatprep.subr.bf16.mxu0 0
        %759 = vmatpush1.bf16.msra.mxu0 %v675
        %760 = vmatprep.subr.bf16.mxu0 0
        %761 = vmatpush1.bf16.msra.mxu0 %v678
        %762 = vmatprep.subr.bf16.mxu0 0
        %763 = vmatpush1.bf16.msra.mxu0 0
        %764 = vmatprep.subr.bf16.mxu0 0
        %765 = vmatpush1.bf16.msra.mxu0 0
        %766 = vmatprep.subr.bf16.mxu0 0
        %767 = vmatpush1.bf16.msra.mxu0 0
        %768 = vmatprep.subr.bf16.mxu0 0
        %769 = vmatpush1.bf16.msra.mxu0 0
        %770 = vmatprep.subr.bf16.mxu0 0
        %771 = vmatpush1.bf16.msra.mxu0 0
        %772 = vmatprep.subr.bf16.mxu0 0
        %773 = vmatpush1.bf16.msra.mxu0 0
        %774 = vmatprep.subr.bf16.mxu0 0
        %775 = vmatpush1.bf16.msra.mxu0 0
        %776 = vmatprep.subr.bf16.mxu0 0
        %777 = vmatpush1.bf16.msra.mxu0 0
        %778 = vmatprep.mubr.bf16.mxu0 0
        %779 = vmatmul.mubr.bf16.gmra.mrb[0].mxu0 %v531
        %v780 = vpop.f32.mrb[0].mxu0
        %v781 = vadd.f32 0.0, %v780
        %v782 = vpop.f32.mrb[0].mxu0
        %v783 = vpop.f32.mrb[0].mxu0
        %v784 = vadd.f32 0.0, %v783
        %v785 = vpop.f32.mrb[0].mxu0
        %786 = vdwg.mxu0
        %v787 = vadd.f32 %v738, %v532
        %v788 = vadd.f32 %v742, %v532
        %v789 = vmul.f32 %v787, 0.125
        %v790 = vmul.f32 %v788, 0.125
        %v791 = vpack.c.bf16 %v789, %v789
        %v792 = vpack.c.bf16 %v790, %v790
        %v793 = vadd.f32 %v740, %v533
        %v794 = vadd.f32 %v744, %v533
        %v795 = vpack.c.bf16 %v793, %v793
        %v796 = vpack.c.bf16 %v794, %v794
        %v797 = vadd.f32 %v781, %v534
        %v798 = vadd.f32 %v784, %v534
        %v799 = vpack.c.bf16 %v797, %v797
        %v800 = vpack.c.bf16 %v798, %v798
        %v801 = vld [vmem:[%s1] sm:$0x1]
        %v802 = vld [vmem:[%s1 + $0x1] sm:$0x1]
        %v805 = vlaneseq
        %v806 = vshrl.u32 %v805, 7
        %v807 = vsub.s32 0, %v806
        %v808 = vrot.slane %v801, %v807
        %v809 = vlaneseq
        %v810 = vshrl.u32 %v809, 7
        %v811 = vsub.s32 0, %v810
        %v812 = vrot.slane %v802, %v811
        %vm815 = vcmask 523264
        %v817 = vsel %vm815, %v791, 0
        %v820 = vsel %vm815, %v795, 0
        %822 = vmatprep.subr.bf16.mxu0 0
        %823 = vmatpush1.bf16.xpose.msra.mxu0 %v820
        %824 = vmatprep.subr.bf16.mxu0 0
        %825 = vmatpush1.bf16.xpose.msra.mxu0 0
        %826 = vmatprep.subr.bf16.mxu0 0
        %827 = vmatpush1.bf16.xpose.msra.mxu0 0
        %828 = vmatprep.subr.bf16.mxu0 0
        %829 = vmatpush1.bf16.xpose.msra.mxu0 0
        %830 = vmatprep.subr.bf16.mxu0 0
        %831 = vmatpush1.bf16.xpose.msra.mxu0 0
        %832 = vmatprep.subr.bf16.mxu0 0
        %833 = vmatpush1.bf16.xpose.msra.mxu0 0
        %834 = vmatprep.subr.bf16.mxu0 0
        %835 = vmatpush1.bf16.xpose.msra.mxu0 0
        %836 = vmatprep.subr.bf16.mxu0 0
        %837 = vmatpush1.bf16.xpose.msra.mxu0 0
        %838 = vmatprep.subr.bf16.mxu0 0
        %839 = vmatpush1.bf16.xpose.msra.mxu0 0
        %840 = vmatprep.subr.bf16.mxu0 0
        %841 = vmatpush1.bf16.xpose.msra.mxu0 0
        %842 = vmatprep.subr.bf16.mxu0 0
        %843 = vmatpush1.bf16.xpose.msra.mxu0 0
        %844 = vmatprep.subr.bf16.mxu0 0
        %845 = vmatpush1.bf16.xpose.msra.mxu0 0
        %846 = vmatprep.subr.bf16.mxu0 0
        %847 = vmatpush1.bf16.xpose.msra.mxu0 0
        %848 = vmatprep.subr.bf16.mxu0 0
        %849 = vmatpush1.bf16.xpose.msra.mxu0 0
        %850 = vmatprep.subr.bf16.mxu0 0
        %851 = vmatpush1.bf16.xpose.msra.mxu0 0
        %852 = vmatprep.subr.bf16.mxu0 0
        %853 = vmatpush1.bf16.xpose.msra.mxu0 0
        %854 = vmatprep.mubr.bf16.mxu0 0
        %855 = vmatmul.mubr.bf16.gmra.mrb[0].mxu0 %v817
        %v856 = vpop.f32.mrb[0].mxu0
        %v857 = vadd.f32 %v808, %v856
        %v858 = vpop.f32.mrb[0].mxu0
        %v859 = vpop.f32.mrb[0].mxu0
        %v860 = vpop.f32.mrb[0].mxu0
        %861 = vdwg.mxu0
        %v863 = vsel %vm815, %v792, 0
        %v866 = vsel %vm815, %v796, 0
        %868 = vmatprep.subr.bf16.mxu0 0
        %869 = vmatpush1.bf16.xpose.msra.mxu0 %v866
        %870 = vmatprep.subr.bf16.mxu0 0
        %871 = vmatpush1.bf16.xpose.msra.mxu0 0
        %872 = vmatprep.subr.bf16.mxu0 0
        %873 = vmatpush1.bf16.xpose.msra.mxu0 0
        %874 = vmatprep.subr.bf16.mxu0 0
        %875 = vmatpush1.bf16.xpose.msra.mxu0 0
        %876 = vmatprep.subr.bf16.mxu0 0
        %877 = vmatpush1.bf16.xpose.msra.mxu0 0
        %878 = vmatprep.subr.bf16.mxu0 0
        %879 = vmatpush1.bf16.xpose.msra.mxu0 0
        %880 = vmatprep.subr.bf16.mxu0 0
        %881 = vmatpush1.bf16.xpose.msra.mxu0 0
        %882 = vmatprep.subr.bf16.mxu0 0
        %883 = vmatpush1.bf16.xpose.msra.mxu0 0
        %884 = vmatprep.subr.bf16.mxu0 0
        %885 = vmatpush1.bf16.xpose.msra.mxu0 0
        %886 = vmatprep.subr.bf16.mxu0 0
        %887 = vmatpush1.bf16.xpose.msra.mxu0 0
        %888 = vmatprep.subr.bf16.mxu0 0
        %889 = vmatpush1.bf16.xpose.msra.mxu0 0
        %890 = vmatprep.subr.bf16.mxu0 0
        %891 = vmatpush1.bf16.xpose.msra.mxu0 0
        %892 = vmatprep.subr.bf16.mxu0 0
        %893 = vmatpush1.bf16.xpose.msra.mxu0 0
        %894 = vmatprep.subr.bf16.mxu0 0
        %895 = vmatpush1.bf16.xpose.msra.mxu0 0
        %896 = vmatprep.subr.bf16.mxu0 0
        %897 = vmatpush1.bf16.xpose.msra.mxu0 0
        %898 = vmatprep.subr.bf16.mxu0 0
        %899 = vmatpush1.bf16.xpose.msra.mxu0 0
        %900 = vmatprep.mubr.bf16.mxu0 0
        %901 = vmatmul.mubr.bf16.gmra.mrb[0].mxu0 %v863
        %v902 = vpop.f32.mrb[0].mxu0
        %v903 = vadd.f32 %v812, %v902
        %v904 = vpop.f32.mrb[0].mxu0
        %v905 = vpop.f32.mrb[0].mxu0
        %v906 = vpop.f32.mrb[0].mxu0
        %907 = vdwg.mxu0
        %vm908 = vcmask 64512
        %v909 = vsel %vm908, %v857, -inf
        %910 = vmax.xlane.f32.xlu0 %v909
        %v911 = vpop.xlane.xlu0 %910
        %v912 = vsel %vm908, %v903, -inf
        %913 = vmax.xlane.f32.xlu0 %v912
        %v914 = vpop.xlane.xlu0 %913
        %v915 = vsub.f32 %v857, %v911
        %v916 = vsub.f32 %v903, %v914
        %v917 = vmul.f32 %v915, 1.442695
        %v918 = vpow.pop %v917
        %v919 = vmul.f32 %v916, 1.442695
        %v920 = vpow.pop %v919
        %v921 = vsel %vm908, %v918, 0.0
        %922 = vadd.xlane.f32.xlu0 %v921
        %v923 = vpop.xlane.xlu0 %922
        %v924 = vsel %vm908, %v920, 0.0
        %925 = vadd.xlane.f32.xlu0 %v924
        %v926 = vpop.xlane.xlu0 %925
        %v927 = vrcp.pop %v923
        %v928 = vrcp.pop %v926
        %v929 = vmul.f32 %v918, %v927
        %v930 = vmul.f32 %v920, %v928
        %v931 = vpack.c.bf16 %v929, %v929
        %v932 = vpack.c.bf16 %v930, %v930
        %v934 = vsel %vm908, %v931, 0
        %vm936 = vcmask 1043456
        %v938 = vsel %vm936, %v799, 0
        %940 = vmatprep.subr.bf16.mxu0 0
        %941 = vmatpush1.bf16.msra.mxu0 %v938
        %942 = vmatprep.subr.bf16.mxu0 0
        %943 = vmatpush1.bf16.msra.mxu0 0
        %944 = vmatprep.subr.bf16.mxu0 0
        %945 = vmatpush1.bf16.msra.mxu0 0
        %946 = vmatprep.subr.bf16.mxu0 0
        %947 = vmatpush1.bf16.msra.mxu0 0
        %948 = vmatprep.subr.bf16.mxu0 0
        %949 = vmatpush1.bf16.msra.mxu0 0
        %950 = vmatprep.subr.bf16.mxu0 0
        %951 = vmatpush1.bf16.msra.mxu0 0
        %952 = vmatprep.subr.bf16.mxu0 0
        %953 = vmatpush1.bf16.msra.mxu0 0
        %954 = vmatprep.subr.bf16.mxu0 0
        %955 = vmatpush1.bf16.msra.mxu0 0
        %956 = vmatprep.subr.bf16.mxu0 0
        %957 = vmatpush1.bf16.msra.mxu0 0
        %958 = vmatprep.subr.bf16.mxu0 0
        %959 = vmatpush1.bf16.msra.mxu0 0
        %960 = vmatprep.subr.bf16.mxu0 0
        %961 = vmatpush1.bf16.msra.mxu0 0
        %962 = vmatprep.subr.bf16.mxu0 0
        %963 = vmatpush1.bf16.msra.mxu0 0
        %964 = vmatprep.subr.bf16.mxu0 0
        %965 = vmatpush1.bf16.msra.mxu0 0
        %966 = vmatprep.subr.bf16.mxu0 0
        %967 = vmatpush1.bf16.msra.mxu0 0
        %968 = vmatprep.subr.bf16.mxu0 0
        %969 = vmatpush1.bf16.msra.mxu0 0
        %970 = vmatprep.subr.bf16.mxu0 0
        %971 = vmatpush1.bf16.msra.mxu0 0
        %972 = vmatprep.mubr.bf16.mxu0 0
        %973 = vmatmul.mubr.bf16.gmra.mrb[0].mxu0 %v934
        %v974 = vpop.f32.mrb[0].mxu0
        %v975 = vadd.f32 0.0, %v974
        %v976 = vpop.f32.mrb[0].mxu0
        %v977 = vpop.f32.mrb[0].mxu0
        %v978 = vpop.f32.mrb[0].mxu0
        %979 = vdwg.mxu0
        %v981 = vsel %vm908, %v932, 0
        %v984 = vsel %vm936, %v800, 0
        %986 = vmatprep.subr.bf16.mxu0 0
        %987 = vmatpush1.bf16.msra.mxu0 %v984
        %988 = vmatprep.subr.bf16.mxu0 0
        %989 = vmatpush1.bf16.msra.mxu0 0
        %990 = vmatprep.subr.bf16.mxu0 0
        %991 = vmatpush1.bf16.msra.mxu0 0
        %992 = vmatprep.subr.bf16.mxu0 0
        %993 = vmatpush1.bf16.msra.mxu0 0
        %994 = vmatprep.subr.bf16.mxu0 0
        %995 = vmatpush1.bf16.msra.mxu0 0
        %996 = vmatprep.subr.bf16.mxu0 0
        %997 = vmatpush1.bf16.msra.mxu0 0
        %998 = vmatprep.subr.bf16.mxu0 0
        %999 = vmatpush1.bf16.msra.mxu0 0
        %1000 = vmatprep.subr.bf16.mxu0 0
        %1001 = vmatpush1.bf16.msra.mxu0 0
        %1002 = vmatprep.subr.bf16.mxu0 0
        %1003 = vmatpush1.bf16.msra.mxu0 0
        %1004 = vmatprep.subr.bf16.mxu0 0
        %1005 = vmatpush1.bf16.msra.mxu0 0
        %1006 = vmatprep.subr.bf16.mxu0 0
        %1007 = vmatpush1.bf16.msra.mxu0 0
        %1008 = vmatprep.subr.bf16.mxu0 0
        %1009 = vmatpush1.bf16.msra.mxu0 0
        %1010 = vmatprep.subr.bf16.mxu0 0
        %1011 = vmatpush1.bf16.msra.mxu0 0
        %1012 = vmatprep.subr.bf16.mxu0 0
        %1013 = vmatpush1.bf16.msra.mxu0 0
        %1014 = vmatprep.subr.bf16.mxu0 0
        %1015 = vmatpush1.bf16.msra.mxu0 0
        %1016 = vmatprep.subr.bf16.mxu0 0
        %1017 = vmatpush1.bf16.msra.mxu0 0
        %1018 = vmatprep.mubr.bf16.mxu0 0
        %1019 = vmatmul.mubr.bf16.gmra.mrb[0].mxu0 %v981
        %v1020 = vpop.f32.mrb[0].mxu0
        %v1021 = vadd.f32 0.0, %v1020
        %v1022 = vpop.f32.mrb[0].mxu0
        %v1023 = vpop.f32.mrb[0].mxu0
        %v1024 = vpop.f32.mrb[0].mxu0
        %1025 = vdwg.mxu0
        %v1026 = vpack.c.bf16 %v1021, %v975
        %v1027 = vld [vmem:[%s477] sm:$0xf]
        %v1028 = vld [vmem:[%s477 + $0x4] sm:$0xf]
        %v1029 = vld [vmem:[%s477 + $0x8] sm:$0xf]
        %v1030 = vld [vmem:[%s477 + $0xc] sm:$0xf]
        %v1031 = vld [vmem:[%s477 + $0x10] sm:$0xf]
        %v1032 = vld [vmem:[%s477 + $0x14] sm:$0xf]
        %v1033 = vld [vmem:[%s477 + $0x18] sm:$0xf]
        %v1034 = vld [vmem:[%s477 + $0x1c] sm:$0xf]
        %1036 = vrot.lane.b32.xlu0 %v791, 64
        %v1037 = vpop.permute.xlu0 %1036
        %1039 = vrot.lane.b32.xlu0 %v795, 64
        %v1040 = vpop.permute.xlu0 %1039
        %v1042 = vsel %vm815, %v1037, 0
        %v1045 = vsel %vm815, %v1040, 0
        %1047 = vmatprep.subr.bf16.mxu0 0
        %1048 = vmatpush1.bf16.xpose.msra.mxu0 %v1045
        %1049 = vmatprep.subr.bf16.mxu0 0
        %1050 = vmatpush1.bf16.xpose.msra.mxu0 0
        %1051 = vmatprep.subr.bf16.mxu0 0
        %1052 = vmatpush1.bf16.xpose.msra.mxu0 0
        %1053 = vmatprep.subr.bf16.mxu0 0
        %1054 = vmatpush1.bf16.xpose.msra.mxu0 0
        %1055 = vmatprep.subr.bf16.mxu0 0
        %1056 = vmatpush1.bf16.xpose.msra.mxu0 0
        %1057 = vmatprep.subr.bf16.mxu0 0
        %1058 = vmatpush1.bf16.xpose.msra.mxu0 0
        %1059 = vmatprep.subr.bf16.mxu0 0
        %1060 = vmatpush1.bf16.xpose.msra.mxu0 0
        %1061 = vmatprep.subr.bf16.mxu0 0
        %1062 = vmatpush1.bf16.xpose.msra.mxu0 0
        %1063 = vmatprep.subr.bf16.mxu0 0
        %1064 = vmatpush1.bf16.xpose.msra.mxu0 0
        %1065 = vmatprep.subr.bf16.mxu0 0
        %1066 = vmatpush1.bf16.xpose.msra.mxu0 0
        %1067 = vmatprep.subr.bf16.mxu0 0
        %1068 = vmatpush1.bf16.xpose.msra.mxu0 0
        %1069 = vmatprep.subr.bf16.mxu0 0
        %1070 = vmatpush1.bf16.xpose.msra.mxu0 0
        %1071 = vmatprep.subr.bf16.mxu0 0
        %1072 = vmatpush1.bf16.xpose.msra.mxu0 0
        %1073 = vmatprep.subr.bf16.mxu0 0
        %1074 = vmatpush1.bf16.xpose.msra.mxu0 0
        %1075 = vmatprep.subr.bf16.mxu0 0
        %1076 = vmatpush1.bf16.xpose.msra.mxu0 0
        %1077 = vmatprep.subr.bf16.mxu0 0
        %1078 = vmatpush1.bf16.xpose.msra.mxu0 0
        %1079 = vmatprep.mubr.bf16.mxu0 0
        %1080 = vmatmul.mubr.bf16.gmra.mrb[0].mxu0 %v1042
        %v1081 = vpop.f32.mrb[0].mxu0
        %v1082 = vadd.f32 %v808, %v1081
        %v1083 = vpop.f32.mrb[0].mxu0
        %v1084 = vpop.f32.mrb[0].mxu0
        %v1085 = vpop.f32.mrb[0].mxu0
        %1086 = vdwg.mxu0
        %1088 = vrot.lane.b32.xlu0 %v792, 64
        %v1089 = vpop.permute.xlu0 %1088
        %1091 = vrot.lane.b32.xlu0 %v796, 64
        %v1092 = vpop.permute.xlu0 %1091
        %v1094 = vsel %vm815, %v1089, 0
        %v1097 = vsel %vm815, %v1092, 0
        %1099 = vmatprep.subr.bf16.mxu0 0
        %1100 = vmatpush1.bf16.xpose.msra.mxu0 %v1097
        %1101 = vmatprep.subr.bf16.mxu0 0
        %1102 = vmatpush1.bf16.xpose.msra.mxu0 0
        %1103 = vmatprep.subr.bf16.mxu0 0
        %1104 = vmatpush1.bf16.xpose.msra.mxu0 0
        %1105 = vmatprep.subr.bf16.mxu0 0
        %1106 = vmatpush1.bf16.xpose.msra.mxu0 0
        %1107 = vmatprep.subr.bf16.mxu0 0
        %1108 = vmatpush1.bf16.xpose.msra.mxu0 0
        %1109 = vmatprep.subr.bf16.mxu0 0
        %1110 = vmatpush1.bf16.xpose.msra.mxu0 0
        %1111 = vmatprep.subr.bf16.mxu0 0
        %1112 = vmatpush1.bf16.xpose.msra.mxu0 0
        %1113 = vmatprep.subr.bf16.mxu0 0
        %1114 = vmatpush1.bf16.xpose.msra.mxu0 0
        %1115 = vmatprep.subr.bf16.mxu0 0
        %1116 = vmatpush1.bf16.xpose.msra.mxu0 0
        %1117 = vmatprep.subr.bf16.mxu0 0
        %1118 = vmatpush1.bf16.xpose.msra.mxu0 0
        %1119 = vmatprep.subr.bf16.mxu0 0
        %1120 = vmatpush1.bf16.xpose.msra.mxu0 0
        %1121 = vmatprep.subr.bf16.mxu0 0
        %1122 = vmatpush1.bf16.xpose.msra.mxu0 0
        %1123 = vmatprep.subr.bf16.mxu0 0
        %1124 = vmatpush1.bf16.xpose.msra.mxu0 0
        %1125 = vmatprep.subr.bf16.mxu0 0
        %1126 = vmatpush1.bf16.xpose.msra.mxu0 0
        %1127 = vmatprep.subr.bf16.mxu0 0
        %1128 = vmatpush1.bf16.xpose.msra.mxu0 0
        %1129 = vmatprep.subr.bf16.mxu0 0
        %1130 = vmatpush1.bf16.xpose.msra.mxu0 0
        %1131 = vmatprep.mubr.bf16.mxu0 0
        %1132 = vmatmul.mubr.bf16.gmra.mrb[0].mxu0 %v1094
        %v1133 = vpop.f32.mrb[0].mxu0
        %v1134 = vadd.f32 %v812, %v1133
        %v1135 = vpop.f32.mrb[0].mxu0
        %v1136 = vpop.f32.mrb[0].mxu0
        %v1137 = vpop.f32.mrb[0].mxu0
        %1138 = vdwg.mxu0
        %v1139 = vsel %vm908, %v1082, -inf
        %1140 = vmax.xlane.f32.xlu0 %v1139
        %v1141 = vpop.xlane.xlu0 %1140
        %v1142 = vsel %vm908, %v1134, -inf
        %1143 = vmax.xlane.f32.xlu0 %v1142
        %v1144 = vpop.xlane.xlu0 %1143
        %v1145 = vsub.f32 %v1082, %v1141
        %v1146 = vsub.f32 %v1134, %v1144
        %v1147 = vmul.f32 %v1145, 1.442695
        %v1148 = vpow.pop %v1147
        %v1149 = vmul.f32 %v1146, 1.442695
        %v1150 = vpow.pop %v1149
        %v1151 = vsel %vm908, %v1148, 0.0
        %1152 = vadd.xlane.f32.xlu0 %v1151
        %v1153 = vpop.xlane.xlu0 %1152
        %v1154 = vsel %vm908, %v1150, 0.0
        %1155 = vadd.xlane.f32.xlu0 %v1154
        %v1156 = vpop.xlane.xlu0 %1155
        %v1157 = vrcp.pop %v1153
        %v1158 = vrcp.pop %v1156
        %v1159 = vmul.f32 %v1148, %v1157
        %v1160 = vmul.f32 %v1150, %v1158
        %v1161 = vpack.c.bf16 %v1159, %v1159
        %v1162 = vpack.c.bf16 %v1160, %v1160
        %1164 = vrot.lane.b32.xlu0 %v799, 64
        %v1165 = vpop.permute.xlu0 %1164
        %v1167 = vsel %vm908, %v1161, 0
        %v1170 = vsel %vm936, %v1165, 0
        %1172 = vmatprep.subr.bf16.mxu0 0
        %1173 = vmatpush1.bf16.msra.mxu0 %v1170
        %1174 = vmatprep.subr.bf16.mxu0 0
        %1175 = vmatpush1.bf16.msra.mxu0 0
        %1176 = vmatprep.subr.bf16.mxu0 0
        %1177 = vmatpush1.bf16.msra.mxu0 0
        %1178 = vmatprep.subr.bf16.mxu0 0
        %1179 = vmatpush1.bf16.msra.mxu0 0
        %1180 = vmatprep.subr.bf16.mxu0 0
        %1181 = vmatpush1.bf16.msra.mxu0 0
        %1182 = vmatprep.subr.bf16.mxu0 0
        %1183 = vmatpush1.bf16.msra.mxu0 0
        %1184 = vmatprep.subr.bf16.mxu0 0
        %1185 = vmatpush1.bf16.msra.mxu0 0
        %1186 = vmatprep.subr.bf16.mxu0 0
        %1187 = vmatpush1.bf16.msra.mxu0 0
        %1188 = vmatprep.subr.bf16.mxu0 0
        %1189 = vmatpush1.bf16.msra.mxu0 0
        %1190 = vmatprep.subr.bf16.mxu0 0
        %1191 = vmatpush1.bf16.msra.mxu0 0
        %1192 = vmatprep.subr.bf16.mxu0 0
        %1193 = vmatpush1.bf16.msra.mxu0 0
        %1194 = vmatprep.subr.bf16.mxu0 0
        %1195 = vmatpush1.bf16.msra.mxu0 0
        %1196 = vmatprep.subr.bf16.mxu0 0
        %1197 = vmatpush1.bf16.msra.mxu0 0
        %1198 = vmatprep.subr.bf16.mxu0 0
        %1199 = vmatpush1.bf16.msra.mxu0 0
        %1200 = vmatprep.subr.bf16.mxu0 0
        %1201 = vmatpush1.bf16.msra.mxu0 0
        %1202 = vmatprep.subr.bf16.mxu0 0
        %1203 = vmatpush1.bf16.msra.mxu0 0
        %1204 = vmatprep.mubr.bf16.mxu0 0
        %1205 = vmatmul.mubr.bf16.gmra.mrb[0].mxu0 %v1167
        %v1206 = vpop.f32.mrb[0].mxu0
        %v1207 = vadd.f32 0.0, %v1206
        %v1208 = vpop.f32.mrb[0].mxu0
        %v1209 = vpop.f32.mrb[0].mxu0
        %v1210 = vpop.f32.mrb[0].mxu0
        %1211 = vdwg.mxu0
        %1213 = vrot.lane.b32.xlu0 %v800, 64
        %v1214 = vpop.permute.xlu0 %1213
        %v1216 = vsel %vm908, %v1162, 0
        %v1219 = vsel %vm936, %v1214, 0
        %1221 = vmatprep.subr.bf16.mxu0 0
        %1222 = vmatpush1.bf16.msra.mxu0 %v1219
        %1223 = vmatprep.subr.bf16.mxu0 0
        %1224 = vmatpush1.bf16.msra.mxu0 0
        %1225 = vmatprep.subr.bf16.mxu0 0
        %1226 = vmatpush1.bf16.msra.mxu0 0
        %1227 = vmatprep.subr.bf16.mxu0 0
        %1228 = vmatpush1.bf16.msra.mxu0 0
        %1229 = vmatprep.subr.bf16.mxu0 0
        %1230 = vmatpush1.bf16.msra.mxu0 0
        %1231 = vmatprep.subr.bf16.mxu0 0
        %1232 = vmatpush1.bf16.msra.mxu0 0
        %1233 = vmatprep.subr.bf16.mxu0 0
        %1234 = vmatpush1.bf16.msra.mxu0 0
        %1235 = vmatprep.subr.bf16.mxu0 0
        %1236 = vmatpush1.bf16.msra.mxu0 0
        %1237 = vmatprep.subr.bf16.mxu0 0
        %1238 = vmatpush1.bf16.msra.mxu0 0
        %1239 = vmatprep.subr.bf16.mxu0 0
        %1240 = vmatpush1.bf16.msra.mxu0 0
        %1241 = vmatprep.subr.bf16.mxu0 0
        %1242 = vmatpush1.bf16.msra.mxu0 0
        %1243 = vmatprep.subr.bf16.mxu0 0
        %1244 = vmatpush1.bf16.msra.mxu0 0
        %1245 = vmatprep.subr.bf16.mxu0 0
        %1246 = vmatpush1.bf16.msra.mxu0 0
        %1247 = vmatprep.subr.bf16.mxu0 0
        %1248 = vmatpush1.bf16.msra.mxu0 0
        %1249 = vmatprep.subr.bf16.mxu0 0
        %1250 = vmatpush1.bf16.msra.mxu0 0
        %1251 = vmatprep.subr.bf16.mxu0 0
        %1252 = vmatpush1.bf16.msra.mxu0 0
        %1253 = vmatprep.mubr.bf16.mxu0 0
        %1254 = vmatmul.mubr.bf16.gmra.mrb[0].mxu0 %v1216
        %v1255 = vpop.f32.mrb[0].mxu0
        %v1256 = vadd.f32 0.0, %v1255
        %v1257 = vpop.f32.mrb[0].mxu0
        %v1258 = vpop.f32.mrb[0].mxu0
        %v1259 = vpop.f32.mrb[0].mxu0
        %1260 = vdwg.mxu0
        %v1261 = vpack.c.bf16 %v1256, %v1207
        %v1262 = vld [vmem:[%s477 + $0x20] sm:$0xf]
        %v1263 = vld [vmem:[%s477 + $0x24] sm:$0xf]
        %v1264 = vld [vmem:[%s477 + $0x28] sm:$0xf]
        %v1265 = vld [vmem:[%s477 + $0x2c] sm:$0xf]
        %v1266 = vld [vmem:[%s477 + $0x30] sm:$0xf]
        %v1267 = vld [vmem:[%s477 + $0x34] sm:$0xf]
        %v1268 = vld [vmem:[%s477 + $0x38] sm:$0xf]
        %v1269 = vld [vmem:[%s477 + $0x3c] sm:$0xf]
        %v1278 = vunpack.c.l.b16 %v1262
        %v1279 = vunpack.c.l.b16 %v1263
        %v1280 = vunpack.c.l.b16 %v1264
        %v1281 = vunpack.c.l.b16 %v1265
        %v1282 = vunpack.c.l.b16 %v1266
        %v1283 = vunpack.c.l.b16 %v1267
        %v1284 = vunpack.c.l.b16 %v1268
        %v1285 = vunpack.c.l.b16 %v1269
        %v1286 = vpack.c.b16 %v1279, %v1278
        %v1287 = vpack.c.b16 %v1281, %v1280
        %v1288 = vpack.c.b16 %v1283, %v1282
        %v1289 = vpack.c.b16 %v1285, %v1284
        %v1295 = vsel %vm815, %v1261, 0
        %1297 = vmatprep.subr.bf16.mxu0 0
        %1298 = vmatpush1.bf16.msra.mxu0 %v1286
        %1299 = vmatprep.subr.bf16.mxu0 0
        %1300 = vmatpush1.bf16.msra.mxu0 %v1287
        %1301 = vmatprep.subr.bf16.mxu0 0
        %1302 = vmatpush1.bf16.msra.mxu0 %v1288
        %1303 = vmatprep.subr.bf16.mxu0 0
        %1304 = vmatpush1.bf16.msra.mxu0 %v1289
        %1305 = vmatprep.subr.bf16.mxu0 0
        %1306 = vmatpush1.bf16.msra.mxu0 0
        %1307 = vmatprep.subr.bf16.mxu0 0
        %1308 = vmatpush1.bf16.msra.mxu0 0
        %1309 = vmatprep.subr.bf16.mxu0 0
        %1310 = vmatpush1.bf16.msra.mxu0 0
        %1311 = vmatprep.subr.bf16.mxu0 0
        %1312 = vmatpush1.bf16.msra.mxu0 0
        %1313 = vmatprep.subr.bf16.mxu0 0
        %1314 = vmatpush1.bf16.msra.mxu0 0
        %1315 = vmatprep.subr.bf16.mxu0 0
        %1316 = vmatpush1.bf16.msra.mxu0 0
        %1317 = vmatprep.subr.bf16.mxu0 0
        %1318 = vmatpush1.bf16.msra.mxu0 0
        %1319 = vmatprep.subr.bf16.mxu0 0
        %1320 = vmatpush1.bf16.msra.mxu0 0
        %1321 = vmatprep.subr.bf16.mxu0 0
        %1322 = vmatpush1.bf16.msra.mxu0 0
        %1323 = vmatprep.subr.bf16.mxu0 0
        %1324 = vmatpush1.bf16.msra.mxu0 0
        %1325 = vmatprep.subr.bf16.mxu0 0
        %1326 = vmatpush1.bf16.msra.mxu0 0
        %1327 = vmatprep.subr.bf16.mxu0 0
        %1328 = vmatpush1.bf16.msra.mxu0 0
        %1329 = vmatprep.mubr.bf16.mxu0 0
        %1330 = vmatmul.mubr.bf16.gmra.mrb[0].mxu0 %v1295
        %v1331 = vpop.f32.mrb[0].mxu0
        %v1332 = vadd.f32 0.0, %v1331
        %v1333 = vpop.f32.mrb[0].mxu0
        %v1334 = vpop.f32.mrb[0].mxu0
        %v1335 = vadd.f32 0.0, %v1334
        %v1336 = vpop.f32.mrb[0].mxu0
        %1337 = vdwg.mxu0
        %v1346 = vunpack.c.l.b16 %v1027
        %v1347 = vunpack.c.l.b16 %v1028
        %v1348 = vunpack.c.l.b16 %v1029
        %v1349 = vunpack.c.l.b16 %v1030
        %v1350 = vunpack.c.l.b16 %v1031
        %v1351 = vunpack.c.l.b16 %v1032
        %v1352 = vunpack.c.l.b16 %v1033
        %v1353 = vunpack.c.l.b16 %v1034
        %v1354 = vpack.c.b16 %v1347, %v1346
        %v1355 = vpack.c.b16 %v1349, %v1348
        %v1356 = vpack.c.b16 %v1351, %v1350
        %v1357 = vpack.c.b16 %v1353, %v1352
        %v1363 = vsel %vm815, %v1026, 0
        %1365 = vmatprep.subr.bf16.mxu0 0
        %1366 = vmatpush1.bf16.msra.mxu0 %v1354
        %1367 = vmatprep.subr.bf16.mxu0 0
        %1368 = vmatpush1.bf16.msra.mxu0 %v1355
        %1369 = vmatprep.subr.bf16.mxu0 0
        %1370 = vmatpush1.bf16.msra.mxu0 %v1356
        %1371 = vmatprep.subr.bf16.mxu0 0
        %1372 = vmatpush1.bf16.msra.mxu0 %v1357
        %1373 = vmatprep.subr.bf16.mxu0 0
        %1374 = vmatpush1.bf16.msra.mxu0 0
        %1375 = vmatprep.subr.bf16.mxu0 0
        %1376 = vmatpush1.bf16.msra.mxu0 0
        %1377 = vmatprep.subr.bf16.mxu0 0
        %1378 = vmatpush1.bf16.msra.mxu0 0
        %1379 = vmatprep.subr.bf16.mxu0 0
        %1380 = vmatpush1.bf16.msra.mxu0 0
        %1381 = vmatprep.subr.bf16.mxu0 0
        %1382 = vmatpush1.bf16.msra.mxu0 0
        %1383 = vmatprep.subr.bf16.mxu0 0
        %1384 = vmatpush1.bf16.msra.mxu0 0
        %1385 = vmatprep.subr.bf16.mxu0 0
        %1386 = vmatpush1.bf16.msra.mxu0 0
        %1387 = vmatprep.subr.bf16.mxu0 0
        %1388 = vmatpush1.bf16.msra.mxu0 0
        %1389 = vmatprep.subr.bf16.mxu0 0
        %1390 = vmatpush1.bf16.msra.mxu0 0
        %1391 = vmatprep.subr.bf16.mxu0 0
        %1392 = vmatpush1.bf16.msra.mxu0 0
        %1393 = vmatprep.subr.bf16.mxu0 0
        %1394 = vmatpush1.bf16.msra.mxu0 0
        %1395 = vmatprep.subr.bf16.mxu0 0
        %1396 = vmatpush1.bf16.msra.mxu0 0
        %1397 = vmatprep.mubr.bf16.mxu0 0
        %1398 = vmatmul.mubr.bf16.gmra.mrb[0].mxu0 %v1363
        %v1399 = vpop.f32.mrb[0].mxu0
        %v1400 = vadd.f32 %v1332, %v1399
        %v1401 = vpop.f32.mrb[0].mxu0
        %v1402 = vpop.f32.mrb[0].mxu0
        %v1403 = vadd.f32 %v1335, %v1402
        %v1404 = vpop.f32.mrb[0].mxu0
        %1405 = vdwg.mxu0
        %v1406 = vadd.f32 %v1400, %v535
        %v1407 = vadd.f32 %v1403, %v535
        %v1408 = vadd.f32 %v529, %v1406
        %v1409 = vadd.f32 %v530, %v1407
        %1410 = vadd.xlane.f32.xlu0 %v1408
        %v1411 = vpop.xlane.xlu0 %1410
        %1412 = vadd.xlane.f32.xlu0 %v1409
        %v1413 = vpop.xlane.xlu0 %1412
        %v1414 = vrcp.pop 128.0
        %v1415 = vmul.f32 %v1411, %v1414
        %v1416 = vmul.f32 %v1413, %v1414
        %v1417 = vsub.f32 %v1408, %v1415
        %v1418 = vsub.f32 %v1409, %v1416
        %v1419 = vmul.f32 %v1417, %v1417
        %v1420 = vmul.f32 %v1418, %v1418
        %1421 = vadd.xlane.f32.xlu0 %v1419
        %v1422 = vpop.xlane.xlu0 %1421
        %1423 = vadd.xlane.f32.xlu0 %v1420
        %v1424 = vpop.xlane.xlu0 %1423
        %v1425 = vmul.f32 %v1422, %v1414
        %v1426 = vmul.f32 %v1424, %v1414
        %v1427 = vadd.f32 %v1425, 1e-12
        %v1428 = vadd.f32 %v1426, 1e-12
        %v1429 = vrsqrt.pop %v1427
        %v1430 = vrsqrt.pop %v1428
        %v1431 = vmul.f32 %v1417, %v1429
        %v1432 = vmul.f32 %v1418, %v1430
        %v1433 = vmul.f32 %v1431, %v539
        %v1434 = vmul.f32 %v1432, %v539
        %v1435 = vadd.f32 %v1433, %v540
        %v1436 = vadd.f32 %v1434, %v540
        %v1437 = vpack.c.bf16 %v1436, %v1435
        %v1438 = vld [vmem:[%s412] sm:$0xff]
        %v1439 = vld [vmem:[%s412 + $0x8] sm:$0xff]
        %v1440 = vld [vmem:[%s412 + $0x10] sm:$0xff]
        %v1441 = vld [vmem:[%s412 + $0x18] sm:$0xff]
        %v1442 = vld [vmem:[%s412 + $0x20] sm:$0xff]
        %v1443 = vld [vmem:[%s412 + $0x28] sm:$0xff]
        %v1444 = vld [vmem:[%s412 + $0x30] sm:$0xff]
        %v1445 = vld [vmem:[%s412 + $0x38] sm:$0xff]
        %v1446 = vld [vmem:[%s412 + $0x40] sm:$0xff]
        %v1447 = vld [vmem:[%s412 + $0x48] sm:$0xff]
        %v1448 = vld [vmem:[%s412 + $0x50] sm:$0xff]
        %v1449 = vld [vmem:[%s412 + $0x58] sm:$0xff]
        %v1450 = vld [vmem:[%s412 + $0x60] sm:$0xff]
        %v1451 = vld [vmem:[%s412 + $0x68] sm:$0xff]
        %v1452 = vld [vmem:[%s412 + $0x70] sm:$0xff]
        %v1453 = vld [vmem:[%s412 + $0x78] sm:$0xff]
        %v1455 = vlaneseq
        %v1456 = vshrl.u32 %v1455, 7
        %v1457 = vsub.s32 0, %v1456
        %v1458 = vrot.slane %v537, %v1457
        %v1459 = vlaneseq
        %v1460 = vshrl.u32 %v1459, 7
        %v1461 = vsub.s32 1, %v1460
        %v1462 = vrot.slane %v537, %v1461
        %v1481 = vunpack.c.l.b16 %v1438
        %v1482 = vunpack.c.h.b16 %v1438
        %v1483 = vunpack.c.l.b16 %v1439
        %v1484 = vunpack.c.h.b16 %v1439
        %v1485 = vunpack.c.l.b16 %v1440
        %v1486 = vunpack.c.h.b16 %v1440
        %v1487 = vunpack.c.l.b16 %v1441
        %v1488 = vunpack.c.h.b16 %v1441
        %v1489 = vunpack.c.l.b16 %v1442
        %v1490 = vunpack.c.h.b16 %v1442
        %v1491 = vunpack.c.l.b16 %v1443
        %v1492 = vunpack.c.h.b16 %v1443
        %v1493 = vunpack.c.l.b16 %v1444
        %v1494 = vunpack.c.h.b16 %v1444
        %v1495 = vunpack.c.l.b16 %v1445
        %v1496 = vunpack.c.h.b16 %v1445
        %v1497 = vunpack.c.l.b16 %v1446
        %v1498 = vunpack.c.h.b16 %v1446
        %v1499 = vunpack.c.l.b16 %v1447
        %v1500 = vunpack.c.h.b16 %v1447
        %v1501 = vunpack.c.l.b16 %v1448
        %v1502 = vunpack.c.h.b16 %v1448
        %v1503 = vunpack.c.l.b16 %v1449
        %v1504 = vunpack.c.h.b16 %v1449
        %v1505 = vunpack.c.l.b16 %v1450
        %v1506 = vunpack.c.h.b16 %v1450
        %v1507 = vunpack.c.l.b16 %v1451
        %v1508 = vunpack.c.h.b16 %v1451
        %v1509 = vunpack.c.l.b16 %v1452
        %v1510 = vunpack.c.h.b16 %v1452
        %v1511 = vunpack.c.l.b16 %v1453
        %v1512 = vunpack.c.h.b16 %v1453
        %v1513 = vpack.c.b16 %v1483, %v1481
        %v1514 = vpack.c.b16 %v1484, %v1482
        %v1515 = vpack.c.b16 %v1487, %v1485
        %v1516 = vpack.c.b16 %v1488, %v1486
        %v1517 = vpack.c.b16 %v1491, %v1489
        %v1518 = vpack.c.b16 %v1492, %v1490
        %v1519 = vpack.c.b16 %v1495, %v1493
        %v1520 = vpack.c.b16 %v1496, %v1494
        %v1521 = vpack.c.b16 %v1499, %v1497
        %v1522 = vpack.c.b16 %v1500, %v1498
        %v1523 = vpack.c.b16 %v1503, %v1501
        %v1524 = vpack.c.b16 %v1504, %v1502
        %v1525 = vpack.c.b16 %v1507, %v1505
        %v1526 = vpack.c.b16 %v1508, %v1506
        %v1527 = vpack.c.b16 %v1511, %v1509
        %v1528 = vpack.c.b16 %v1512, %v1510
        %1545 = vmatprep.subr.bf16.mxu0 %v1514
        %1546 = vmatpush1.bf16.msra.mxu0 %v1513
        %1547 = vmatprep.subr.bf16.mxu0 %v1516
        %1548 = vmatpush1.bf16.msra.mxu0 %v1515
        %1549 = vmatprep.subr.bf16.mxu0 %v1518
        %1550 = vmatpush1.bf16.msra.mxu0 %v1517
        %1551 = vmatprep.subr.bf16.mxu0 %v1520
        %1552 = vmatpush1.bf16.msra.mxu0 %v1519
        %1553 = vmatprep.subr.bf16.mxu0 %v1522
        %1554 = vmatpush1.bf16.msra.mxu0 %v1521
        %1555 = vmatprep.subr.bf16.mxu0 %v1524
        %1556 = vmatpush1.bf16.msra.mxu0 %v1523
        %1557 = vmatprep.subr.bf16.mxu0 %v1526
        %1558 = vmatpush1.bf16.msra.mxu0 %v1525
        %1559 = vmatprep.subr.bf16.mxu0 %v1528
        %1560 = vmatpush1.bf16.msra.mxu0 %v1527
        %1561 = vmatprep.subr.bf16.mxu0 0
        %1562 = vmatpush1.bf16.msra.mxu0 0
        %1563 = vmatprep.subr.bf16.mxu0 0
        %1564 = vmatpush1.bf16.msra.mxu0 0
        %1565 = vmatprep.subr.bf16.mxu0 0
        %1566 = vmatpush1.bf16.msra.mxu0 0
        %1567 = vmatprep.subr.bf16.mxu0 0
        %1568 = vmatpush1.bf16.msra.mxu0 0
        %1569 = vmatprep.subr.bf16.mxu0 0
        %1570 = vmatpush1.bf16.msra.mxu0 0
        %1571 = vmatprep.subr.bf16.mxu0 0
        %1572 = vmatpush1.bf16.msra.mxu0 0
        %1573 = vmatprep.subr.bf16.mxu0 0
        %1574 = vmatpush1.bf16.msra.mxu0 0
        %1575 = vmatprep.subr.bf16.mxu0 0
        %1576 = vmatpush1.bf16.msra.mxu0 0
        %1577 = vmatprep.mubr.bf16.mxu0 0
        %1578 = vmatmul.mubr.bf16.gmra.mrb[0].mxu0 %v1437
        %v1579 = vpop.f32.mrb[0].mxu0
        %v1580 = vadd.f32 %v1458, %v1579
        %v1581 = vpop.f32.mrb[0].mxu0
        %v1582 = vadd.f32 %v1462, %v1581
        %v1583 = vpop.f32.mrb[0].mxu0
        %v1584 = vadd.f32 %v1458, %v1583
        %v1585 = vpop.f32.mrb[0].mxu0
        %v1586 = vadd.f32 %v1462, %v1585
        %1587 = vdwg.mxu0
        %v1588 = vmul.f32 %v1580, 0.5
        %v1589 = vmul.f32 %v1582, 0.5
        %v1590 = vmul.f32 %v1584, 0.5
        %v1591 = vmul.f32 %v1586, 0.5
        %v1592 = vmul.f32 %v1580, 0.044715
        %v1593 = vmul.f32 %v1582, 0.044715
        %v1594 = vmul.f32 %v1584, 0.044715
        %v1595 = vmul.f32 %v1586, 0.044715
        %v1596 = vmul.f32 %v1592, %v1580
        %v1597 = vmul.f32 %v1593, %v1582
        %v1598 = vmul.f32 %v1594, %v1584
        %v1599 = vmul.f32 %v1595, %v1586
        %v1600 = vmul.f32 %v1596, %v1580
        %v1601 = vmul.f32 %v1597, %v1582
        %v1602 = vmul.f32 %v1598, %v1584
        %v1603 = vmul.f32 %v1599, %v1586
        %v1604 = vadd.f32 %v1580, %v1600
        %v1605 = vadd.f32 %v1582, %v1601
        %v1606 = vadd.f32 %v1584, %v1602
        %v1607 = vadd.f32 %v1586, %v1603
        %v1608 = vmul.f32 %v1604, 0.7978846
        %v1609 = vmul.f32 %v1605, 0.7978846
        %v1610 = vmul.f32 %v1606, 0.7978846
        %v1611 = vmul.f32 %v1607, 0.7978846
        %v1612 = vtanh.pop %v1608
        %v1613 = vtanh.pop %v1609
        %v1614 = vtanh.pop %v1610
        %v1615 = vtanh.pop %v1611
        %v1616 = vadd.f32 %v1612, 1.0
        %v1617 = vadd.f32 %v1613, 1.0
        %v1618 = vadd.f32 %v1614, 1.0
        %v1619 = vadd.f32 %v1615, 1.0
        %v1620 = vmul.f32 %v1588, %v1616
        %v1621 = vmul.f32 %v1589, %v1617
        %v1622 = vmul.f32 %v1590, %v1618
        %v1623 = vmul.f32 %v1591, %v1619
        %v1624 = vpack.c.bf16 %v1622, %v1620
        %v1625 = vpack.c.bf16 %v1623, %v1621
        %v1626 = vld [vmem:[%s421] sm:$0xf]
        %v1627 = vld [vmem:[%s421 + $0x4] sm:$0xf]
        %v1628 = vld [vmem:[%s421 + $0x8] sm:$0xf]
        %v1629 = vld [vmem:[%s421 + $0xc] sm:$0xf]
        %v1630 = vld [vmem:[%s421 + $0x10] sm:$0xf]
        %v1631 = vld [vmem:[%s421 + $0x14] sm:$0xf]
        %v1632 = vld [vmem:[%s421 + $0x18] sm:$0xf]
        %v1633 = vld [vmem:[%s421 + $0x1c] sm:$0xf]
        %v1634 = vld [vmem:[%s421 + $0x20] sm:$0xf]
        %v1635 = vld [vmem:[%s421 + $0x24] sm:$0xf]
        %v1636 = vld [vmem:[%s421 + $0x28] sm:$0xf]
        %v1637 = vld [vmem:[%s421 + $0x2c] sm:$0xf]
        %v1638 = vld [vmem:[%s421 + $0x30] sm:$0xf]
        %v1639 = vld [vmem:[%s421 + $0x34] sm:$0xf]
        %v1640 = vld [vmem:[%s421 + $0x38] sm:$0xf]
        %v1641 = vld [vmem:[%s421 + $0x3c] sm:$0xf]
        %v1642 = vld [vmem:[%s421 + $0x40] sm:$0xf]
        %v1643 = vld [vmem:[%s421 + $0x44] sm:$0xf]
        %v1644 = vld [vmem:[%s421 + $0x48] sm:$0xf]
        %v1645 = vld [vmem:[%s421 + $0x4c] sm:$0xf]
        %v1646 = vld [vmem:[%s421 + $0x50] sm:$0xf]
        %v1647 = vld [vmem:[%s421 + $0x54] sm:$0xf]
        %v1648 = vld [vmem:[%s421 + $0x58] sm:$0xf]
        %v1649 = vld [vmem:[%s421 + $0x5c] sm:$0xf]
        %v1650 = vld [vmem:[%s421 + $0x60] sm:$0xf]
        %v1651 = vld [vmem:[%s421 + $0x64] sm:$0xf]
        %v1652 = vld [vmem:[%s421 + $0x68] sm:$0xf]
        %v1653 = vld [vmem:[%s421 + $0x6c] sm:$0xf]
        %v1654 = vld [vmem:[%s421 + $0x70] sm:$0xf]
        %v1655 = vld [vmem:[%s421 + $0x74] sm:$0xf]
        %v1656 = vld [vmem:[%s421 + $0x78] sm:$0xf]
        %v1657 = vld [vmem:[%s421 + $0x7c] sm:$0xf]
        %v1690 = vunpack.c.l.b16 %v1626
        %v1691 = vunpack.c.l.b16 %v1627
        %v1692 = vunpack.c.l.b16 %v1628
        %v1693 = vunpack.c.l.b16 %v1629
        %v1694 = vunpack.c.l.b16 %v1630
        %v1695 = vunpack.c.l.b16 %v1631
        %v1696 = vunpack.c.l.b16 %v1632
        %v1697 = vunpack.c.l.b16 %v1633
        %v1698 = vunpack.c.l.b16 %v1634
        %v1699 = vunpack.c.l.b16 %v1635
        %v1700 = vunpack.c.l.b16 %v1636
        %v1701 = vunpack.c.l.b16 %v1637
        %v1702 = vunpack.c.l.b16 %v1638
        %v1703 = vunpack.c.l.b16 %v1639
        %v1704 = vunpack.c.l.b16 %v1640
        %v1705 = vunpack.c.l.b16 %v1641
        %v1706 = vunpack.c.l.b16 %v1642
        %v1707 = vunpack.c.l.b16 %v1643
        %v1708 = vunpack.c.l.b16 %v1644
        %v1709 = vunpack.c.l.b16 %v1645
        %v1710 = vunpack.c.l.b16 %v1646
        %v1711 = vunpack.c.l.b16 %v1647
        %v1712 = vunpack.c.l.b16 %v1648
        %v1713 = vunpack.c.l.b16 %v1649
        %v1714 = vunpack.c.l.b16 %v1650
        %v1715 = vunpack.c.l.b16 %v1651
        %v1716 = vunpack.c.l.b16 %v1652
        %v1717 = vunpack.c.l.b16 %v1653
        %v1718 = vunpack.c.l.b16 %v1654
        %v1719 = vunpack.c.l.b16 %v1655
        %v1720 = vunpack.c.l.b16 %v1656
        %v1721 = vunpack.c.l.b16 %v1657
        %v1722 = vpack.c.b16 %v1691, %v1690
        %v1723 = vpack.c.b16 %v1693, %v1692
        %v1724 = vpack.c.b16 %v1695, %v1694
        %v1725 = vpack.c.b16 %v1697, %v1696
        %v1726 = vpack.c.b16 %v1699, %v1698
        %v1727 = vpack.c.b16 %v1701, %v1700
        %v1728 = vpack.c.b16 %v1703, %v1702
        %v1729 = vpack.c.b16 %v1705, %v1704
        %v1730 = vpack.c.b16 %v1707, %v1706
        %v1731 = vpack.c.b16 %v1709, %v1708
        %v1732 = vpack.c.b16 %v1711, %v1710
        %v1733 = vpack.c.b16 %v1713, %v1712
        %v1734 = vpack.c.b16 %v1715, %v1714
        %v1735 = vpack.c.b16 %v1717, %v1716
        %v1736 = vpack.c.b16 %v1719, %v1718
        %v1737 = vpack.c.b16 %v1721, %v1720
        %1754 = vmatprep.subr.bf16.mxu0 0
        %1755 = vmatpush1.bf16.msra.mxu0 %v1722
        %1756 = vmatprep.subr.bf16.mxu0 0
        %1757 = vmatpush1.bf16.msra.mxu0 %v1723
        %1758 = vmatprep.subr.bf16.mxu0 0
        %1759 = vmatpush1.bf16.msra.mxu0 %v1724
        %1760 = vmatprep.subr.bf16.mxu0 0
        %1761 = vmatpush1.bf16.msra.mxu0 %v1725
        %1762 = vmatprep.subr.bf16.mxu0 0
        %1763 = vmatpush1.bf16.msra.mxu0 %v1726
        %1764 = vmatprep.subr.bf16.mxu0 0
        %1765 = vmatpush1.bf16.msra.mxu0 %v1727
        %1766 = vmatprep.subr.bf16.mxu0 0
        %1767 = vmatpush1.bf16.msra.mxu0 %v1728
        %1768 = vmatprep.subr.bf16.mxu0 0
        %1769 = vmatpush1.bf16.msra.mxu0 %v1729
        %1770 = vmatprep.subr.bf16.mxu0 0
        %1771 = vmatpush1.bf16.msra.mxu0 %v1730
        %1772 = vmatprep.subr.bf16.mxu0 0
        %1773 = vmatpush1.bf16.msra.mxu0 %v1731
        %1774 = vmatprep.subr.bf16.mxu0 0
        %1775 = vmatpush1.bf16.msra.mxu0 %v1732
        %1776 = vmatprep.subr.bf16.mxu0 0
        %1777 = vmatpush1.bf16.msra.mxu0 %v1733
        %1778 = vmatprep.subr.bf16.mxu0 0
        %1779 = vmatpush1.bf16.msra.mxu0 %v1734
        %1780 = vmatprep.subr.bf16.mxu0 0
        %1781 = vmatpush1.bf16.msra.mxu0 %v1735
        %1782 = vmatprep.subr.bf16.mxu0 0
        %1783 = vmatpush1.bf16.msra.mxu0 %v1736
        %1784 = vmatprep.subr.bf16.mxu0 0
        %1785 = vmatpush1.bf16.msra.mxu0 %v1737
        %1786 = vmatprep.mubr.bf16.mxu0 %v1625
        %1787 = vmatmul.mubr.bf16.gmra.mrb[0].mxu0 %v1624
        %v1788 = vpop.f32.mrb[0].mxu0
        %v1789 = vadd.f32 %v538, %v1788
        %v1790 = vpop.f32.mrb[0].mxu0
        %v1791 = vpop.f32.mrb[0].mxu0
        %v1792 = vadd.f32 %v538, %v1791
        %v1793 = vpop.f32.mrb[0].mxu0
        %1794 = vdwg.mxu0
        %v1795 = vadd.f32 %v1435, %v1789
        %v1796 = vadd.f32 %v1436, %v1792
        %1797 = vadd.xlane.f32.xlu0 %v1795
        %v1798 = vpop.xlane.xlu0 %1797
        %1799 = vadd.xlane.f32.xlu0 %v1796
        %v1800 = vpop.xlane.xlu0 %1799
        %v1801 = vmul.f32 %v1798, %v1414
        %v1802 = vmul.f32 %v1800, %v1414
        %v1803 = vsub.f32 %v1795, %v1801
        %v1804 = vsub.f32 %v1796, %v1802
        %v1805 = vmul.f32 %v1803, %v1803
        %v1806 = vmul.f32 %v1804, %v1804
        %1807 = vadd.xlane.f32.xlu0 %v1805
        %v1808 = vpop.xlane.xlu0 %1807
        %1809 = vadd.xlane.f32.xlu0 %v1806
        %v1810 = vpop.xlane.xlu0 %1809
        %v1811 = vmul.f32 %v1808, %v1414
        %v1812 = vmul.f32 %v1810, %v1414
        %v1813 = vadd.f32 %v1811, 1e-12
        %v1814 = vadd.f32 %v1812, 1e-12
        %v1815 = vrsqrt.pop %v1813
        %v1816 = vrsqrt.pop %v1814
        %v1817 = vmul.f32 %v1803, %v1815
        %v1818 = vmul.f32 %v1804, %v1816
        %v1819 = vmul.f32 %v1817, %v541
        %v1820 = vmul.f32 %v1818, %v541
        %v1821 = vadd.f32 %v1819, %v542
        %v1822 = vadd.f32 %v1820, %v542
        %1823 = vst [vmem:[#allocation2] sm:$0xff] %v1821
        %1824 = vst [vmem:[#allocation2 + $0x8] sm:$0xff] %v1822
        %p1825 = scmp.eq.s32.totalorder %s28, 1
        // Predicated region
        $region77: #{faithful_bert_classifier_forward.1} parent=59 // pred_check
          %p1826 = pneg %p1825
        $region78: #{faithful_bert_classifier_forward.1} parent=59 // pred_check_branch
          %1828 = sbr.rel (%p1826) target = $region80
        $region79: #{faithful_bert_classifier_forward.1} parent=59 // pred_region
          %v1829 = vpack.c.bf16 %v1821, %v1821
          %v1830 = vpack.c.bf16 %v1822, %v1822
          %v1831 = vld [vmem:[%s3] sm:$0xf]
          %v1832 = vld [vmem:[%s3 + $0x4] sm:$0xf]
          %v1833 = vld [vmem:[%s3 + $0x8] sm:$0xf]
          %v1834 = vld [vmem:[%s3 + $0xc] sm:$0xf]
          %v1835 = vld [vmem:[%s3 + $0x10] sm:$0xf]
          %v1836 = vld [vmem:[%s3 + $0x14] sm:$0xf]
          %v1837 = vld [vmem:[%s3 + $0x18] sm:$0xf]
          %v1838 = vld [vmem:[%s3 + $0x1c] sm:$0xf]
          %v1839 = vld [vmem:[%s3 + $0x20] sm:$0xf]
          %v1840 = vld [vmem:[%s3 + $0x24] sm:$0xf]
          %v1841 = vld [vmem:[%s3 + $0x28] sm:$0xf]
          %v1842 = vld [vmem:[%s3 + $0x2c] sm:$0xf]
          %v1843 = vld [vmem:[%s3 + $0x30] sm:$0xf]
          %v1844 = vld [vmem:[%s3 + $0x34] sm:$0xf]
          %v1845 = vld [vmem:[%s3 + $0x38] sm:$0xf]
          %v1846 = vld [vmem:[%s3 + $0x3c] sm:$0xf]
          %v1847 = vld [vmem:[%s2 + $0x2] sm:$0x1]
          %v1848 = vlaneseq
          %v1849 = vshrl.u32 %v1848, 7
          %v1850 = vsub.s32 0, %v1849
          %v1851 = vrot.slane %v1847, %v1850
          %v1854 = vunpack.c.l.b16 %v1829
          %v1855 = vunpack.c.l.b16 %v1830
          %v1856 = vrot.slane %v1855, 7
          %vm1857 = vcmask 1041409
          %v1858 = vsel %vm1857, %v1856, %v1854
          %v1859 = vpack.c.b16 %v1858, %v1858
          %v1877 = vunpack.c.l.b16 %v1831
          %v1878 = vunpack.c.l.b16 %v1832
          %v1879 = vunpack.c.l.b16 %v1833
          %v1880 = vunpack.c.l.b16 %v1834
          %v1881 = vunpack.c.l.b16 %v1835
          %v1882 = vunpack.c.l.b16 %v1836
          %v1883 = vunpack.c.l.b16 %v1837
          %v1884 = vunpack.c.l.b16 %v1838
          %v1885 = vunpack.c.l.b16 %v1839
          %v1886 = vunpack.c.l.b16 %v1840
          %v1887 = vunpack.c.l.b16 %v1841
          %v1888 = vunpack.c.l.b16 %v1842
          %v1889 = vunpack.c.l.b16 %v1843
          %v1890 = vunpack.c.l.b16 %v1844
          %v1891 = vunpack.c.l.b16 %v1845
          %v1892 = vunpack.c.l.b16 %v1846
          %v1893 = vpack.c.b16 %v1878, %v1877
          %v1894 = vpack.c.b16 %v1880, %v1879
          %v1895 = vpack.c.b16 %v1882, %v1881
          %v1896 = vpack.c.b16 %v1884, %v1883
          %v1897 = vpack.c.b16 %v1886, %v1885
          %v1898 = vpack.c.b16 %v1888, %v1887
          %v1899 = vpack.c.b16 %v1890, %v1889
          %v1900 = vpack.c.b16 %v1892, %v1891
          %1909 = vmatprep.subr.bf16.mxu0 0
          %1910 = vmatpush1.bf16.msra.mxu0 %v1893
          %1911 = vmatprep.subr.bf16.mxu0 0
          %1912 = vmatpush1.bf16.msra.mxu0 %v1894
          %1913 = vmatprep.subr.bf16.mxu0 0
          %1914 = vmatpush1.bf16.msra.mxu0 %v1895
          %1915 = vmatprep.subr.bf16.mxu0 0
          %1916 = vmatpush1.bf16.msra.mxu0 %v1896
          %1917 = vmatprep.subr.bf16.mxu0 0
          %1918 = vmatpush1.bf16.msra.mxu0 %v1897
          %1919 = vmatprep.subr.bf16.mxu0 0
          %1920 = vmatpush1.bf16.msra.mxu0 %v1898
          %1921 = vmatprep.subr.bf16.mxu0 0
          %1922 = vmatpush1.bf16.msra.mxu0 %v1899
          %1923 = vmatprep.subr.bf16.mxu0 0
          %1924 = vmatpush1.bf16.msra.mxu0 %v1900
          %1925 = vmatprep.subr.bf16.mxu0 0
          %1926 = vmatpush1.bf16.msra.mxu0 0
          %1927 = vmatprep.subr.bf16.mxu0 0
          %1928 = vmatpush1.bf16.msra.mxu0 0
          %1929 = vmatprep.subr.bf16.mxu0 0
          %1930 = vmatpush1.bf16.msra.mxu0 0
          %1931 = vmatprep.subr.bf16.mxu0 0
          %1932 = vmatpush1.bf16.msra.mxu0 0
          %1933 = vmatprep.subr.bf16.mxu0 0
          %1934 = vmatpush1.bf16.msra.mxu0 0
          %1935 = vmatprep.subr.bf16.mxu0 0
          %1936 = vmatpush1.bf16.msra.mxu0 0
          %1937 = vmatprep.subr.bf16.mxu0 0
          %1938 = vmatpush1.bf16.msra.mxu0 0
          %1939 = vmatprep.subr.bf16.mxu0 0
          %1940 = vmatpush1.bf16.msra.mxu0 0
          %1941 = vmatprep.mubr.bf16.mxu0 0
          %1942 = vmatmul.mubr.bf16.gmra.mrb[0].mxu0 %v1859
          %v1943 = vpop.f32.mrb[0].mxu0
          %v1944 = vadd.f32 %v1851, %v1943
          %v1945 = vpop.f32.mrb[0].mxu0
          %v1946 = vpop.f32.mrb[0].mxu0
          %v1947 = vpop.f32.mrb[0].mxu0
          %1948 = vdwg.mxu0
          %v1949 = vtanh.pop %v1944
          %v1950 = vpack.c.bf16 %v1949, %v1949
          %v1951 = vld [vmem:[%s4] sm:$0xf]
          %v1952 = vld [vmem:[%s4 + $0x4] sm:$0xf]
          %v1953 = vld [vmem:[%s4 + $0x8] sm:$0xf]
          %v1954 = vld [vmem:[%s4 + $0xc] sm:$0xf]
          %v1955 = vld [vmem:[%s4 + $0x10] sm:$0xf]
          %v1956 = vld [vmem:[%s4 + $0x14] sm:$0xf]
          %v1957 = vld [vmem:[%s4 + $0x18] sm:$0xf]
          %v1958 = vld [vmem:[%s4 + $0x1c] sm:$0xf]
          %v1959 = vld [vmem:[%s4 + $0x20] sm:$0xf]
          %v1960 = vld [vmem:[%s4 + $0x24] sm:$0xf]
          %v1961 = vld [vmem:[%s4 + $0x28] sm:$0xf]
          %v1962 = vld [vmem:[%s4 + $0x2c] sm:$0xf]
          %v1963 = vld [vmem:[%s4 + $0x30] sm:$0xf]
          %v1964 = vld [vmem:[%s4 + $0x34] sm:$0xf]
          %v1965 = vld [vmem:[%s4 + $0x38] sm:$0xf]
          %v1966 = vld [vmem:[%s4 + $0x3c] sm:$0xf]
          %v1967 = vld [vmem:[%s2 + $0x3] sm:$0x1]
          %v1968 = vlaneseq
          %v1969 = vshrl.u32 %v1968, 7
          %v1970 = vsub.s32 0, %v1969
          %v1971 = vrot.slane %v1967, %v1970
          %v1988 = vunpack.c.l.b16 %v1951
          %v1989 = vunpack.c.l.b16 %v1952
          %v1990 = vunpack.c.l.b16 %v1953
          %v1991 = vunpack.c.l.b16 %v1954
          %v1992 = vunpack.c.l.b16 %v1955
          %v1993 = vunpack.c.l.b16 %v1956
          %v1994 = vunpack.c.l.b16 %v1957
          %v1995 = vunpack.c.l.b16 %v1958
          %v1996 = vunpack.c.l.b16 %v1959
          %v1997 = vunpack.c.l.b16 %v1960
          %v1998 = vunpack.c.l.b16 %v1961
          %v1999 = vunpack.c.l.b16 %v1962
          %v2000 = vunpack.c.l.b16 %v1963
          %v2001 = vunpack.c.l.b16 %v1964
          %v2002 = vunpack.c.l.b16 %v1965
          %v2003 = vunpack.c.l.b16 %v1966
          %v2004 = vpack.c.b16 %v1989, %v1988
          %v2005 = vpack.c.b16 %v1991, %v1990
          %v2006 = vpack.c.b16 %v1993, %v1992
          %v2007 = vpack.c.b16 %v1995, %v1994
          %v2008 = vpack.c.b16 %v1997, %v1996
          %v2009 = vpack.c.b16 %v1999, %v1998
          %v2010 = vpack.c.b16 %v2001, %v2000
          %v2011 = vpack.c.b16 %v2003, %v2002
          %2020 = vmatprep.subr.bf16.mxu0 0
          %2021 = vmatpush1.bf16.msra.mxu0 %v2004
          %2022 = vmatprep.subr.bf16.mxu0 0
          %2023 = vmatpush1.bf16.msra.mxu0 %v2005
          %2024 = vmatprep.subr.bf16.mxu0 0
          %2025 = vmatpush1.bf16.msra.mxu0 %v2006
          %2026 = vmatprep.subr.bf16.mxu0 0
          %2027 = vmatpush1.bf16.msra.mxu0 %v2007
          %2028 = vmatprep.subr.bf16.mxu0 0
          %2029 = vmatpush1.bf16.msra.mxu0 %v2008
          %2030 = vmatprep.subr.bf16.mxu0 0
          %2031 = vmatpush1.bf16.msra.mxu0 %v2009
          %2032 = vmatprep.subr.bf16.mxu0 0
          %2033 = vmatpush1.bf16.msra.mxu0 %v2010
          %2034 = vmatprep.subr.bf16.mxu0 0
          %2035 = vmatpush1.bf16.msra.mxu0 %v2011
          %2036 = vmatprep.subr.bf16.mxu0 0
          %2037 = vmatpush1.bf16.msra.mxu0 0
          %2038 = vmatprep.subr.bf16.mxu0 0
          %2039 = vmatpush1.bf16.msra.mxu0 0
          %2040 = vmatprep.subr.bf16.mxu0 0
          %2041 = vmatpush1.bf16.msra.mxu0 0
          %2042 = vmatprep.subr.bf16.mxu0 0
          %2043 = vmatpush1.bf16.msra.mxu0 0
          %2044 = vmatprep.subr.bf16.mxu0 0
          %2045 = vmatpush1.bf16.msra.mxu0 0
          %2046 = vmatprep.subr.bf16.mxu0 0
          %2047 = vmatpush1.bf16.msra.mxu0 0
          %2048 = vmatprep.subr.bf16.mxu0 0
          %2049 = vmatpush1.bf16.msra.mxu0 0
          %2050 = vmatprep.subr.bf16.mxu0 0
          %2051 = vmatpush1.bf16.msra.mxu0 0
          %2052 = vmatprep.mubr.bf16.mxu0 0
          %2053 = vmatmul.mubr.bf16.gmra.mrb[0].mxu0 %v1950
          %v2054 = vpop.f32.mrb[0].mxu0
          %v2055 = vadd.f32 %v1971, %v2054
          %v2056 = vpop.f32.mrb[0].mxu0
          %v2057 = vpop.f32.mrb[0].mxu0
          %v2058 = vpop.f32.mrb[0].mxu0
          %2059 = vdwg.mxu0
          %2060 = vst [vmem:[#allocation9] sm:$0x3] %v2055
        $region80: #{faithful_bert_classifier_forward.1} parent=59 // pred_fallthru
          _
        // Predicated region
        $region81: #{faithful_bert_classifier_forward.1} parent=59 // pred_check
          %p2061 = pneg %p276
        $region82: #{faithful_bert_classifier_forward.1} parent=59 // pred_check_branch
          %2063 = sbr.rel (%p2061) target = $region84
        $region83: #{faithful_bert_classifier_forward.1} parent=59 // pred_region
          %s2065 = ssub.s32 32, 32
          %2066 = vsyncadd [#allocation5], %s2065
          %s2068 = sshll.u32 [#allocation9], 4
          %s2069 = int_to_ptr.vmem [resolvable:$true] %s2068
          %2071 = dma.vmem_to_hbm [thread:$0]  %s2069, 32, %s10, [#allocation5]
        $region84: #{faithful_bert_classifier_forward.1} parent=59 // pred_fallthru
          _
        // Predicated region
        $region85: #{faithful_bert_classifier_forward.1} parent=59 // pred_check
          %p2072 = pneg %p276
        $region86: #{faithful_bert_classifier_forward.1} parent=59 // pred_check_branch
          %2074 = sbr.rel (%p2072) target = $region88
        $region87: #{faithful_bert_classifier_forward.1} parent=59 // pred_region
          %2075 = dma.done [#allocation5], 32
        $region88: #{faithful_bert_classifier_forward.1} parent=59 // pred_fallthru
          _
      $region60: #{faithful_bert_classifier_forward.1} parent=5 // pred_fallthru
        _
      %p2076 = scmp.le.s32.totalorder 2, %s23
      // Predicated region
      $region89: #{faithful_bert_classifier_forward.1} parent=5 // pred_check
        %p2077 = pneg %p2076
      $region90: #{faithful_bert_classifier_forward.1} parent=5 // pred_check_branch
        %2079 = sbr.rel (%p2077) target = $region92
      $region91: #{faithful_bert_classifier_forward.1} parent=5 // pred_region
        %s2080 = ssub.s32 %s23, 2
      $region92: #{faithful_bert_classifier_forward.1} parent=5 // pred_fallthru
        _
    $region6: #{faithful_bert_classifier_forward.1} parent=1 // loop_footer
      %s27 = sadd.s32 1, %s23
    $region7: #{faithful_bert_classifier_forward.1} parent=1 // loop_footer_branch
      %22 = sbr.rel target = $region3
    $region8: #{faithful_bert_classifier_forward.1} parent=1 // loop_exit
      _
    %2081 = vsyncpa [#allocation4], 1
    %s2082 = scalar_lea.sflag [#allocation4], 1
    %2083 = vsyncpa %s2082, 1
    %2084 = vsyncpa [#allocation7], 1
    %s2085 = scalar_lea.sflag [#allocation7], 1
    %2086 = vsyncpa %s2085, 1
    %2087 = vsyncpa [#allocation5], 1
    %s2088 = scalar_lea.sflag [#allocation5], 1
    %2089 = vsyncpa %s2088, 1

</llo_original>
